<compile_context>
chip_gen: v5e
topology: v5e:2x2
jax: 0.10.0
libtpu: 0.0.40
codegen_flags: <defaults>
</compile_context>

<pallas_src>
import functools

import jax
import jax.numpy as jnp
from jax.experimental import pallas as pl
from jax.experimental.pallas import tpu as pltpu


def _layernorm(x, w, b, eps=1e-5):
    # x: (..., D), w/b broadcastable to x -- all float32
    mu = jnp.mean(x, axis=-1, keepdims=True)
    var = jnp.mean(jnp.square(x - mu), axis=-1, keepdims=True)
    return (x - mu) * jax.lax.rsqrt(var + eps) * w + b


def _softmax_last(x, *, approx_recip):
    m = jnp.max(x, axis=-1, keepdims=True)
    e = jnp.exp(x - m)
    return e * pl.reciprocal(jnp.sum(e, axis=-1, keepdims=True), approx=approx_recip)


def gpt_kernel(x_ref,
               ln1w_ref, ln1b_ref,
               wqkv_ref,
               ln2w_ref, ln2b_ref,
               wup_ref, bup_ref, wdn_ref, bdn_ref,
               lnfw_ref, lnfb_ref,
               wout_ref, bout_ref,
               out_ref,
               x_acc_ref,
               *, num_heads):
    l = pl.program_id(1)
    num_layers = pl.num_programs(1)

    # Load the fresh embedding block into the carried activation at the start of the layer sweep.
    @pl.when(l == 0)
    def _():
        x_acc_ref[...] = x_ref[...]

    x = x_acc_ref[...]                       # (Bb, T, D) float32
    Bb, T, D = x.shape
    H = num_heads
    hs = D // H
    scale = 1.0 / float(hs) ** 0.5

    row = jax.lax.broadcasted_iota(jnp.int32, (T, T), 0)
    col = jax.lax.broadcasted_iota(jnp.int32, (T, T), 1)
    causal = row >= col                      # (T, T), True = keep

    # ---------------- multi-headed causal self-attention on LN1(x) ----------------
    h = _layernorm(x, ln1w_ref[0], ln1b_ref[0])                         # (Bb, T, D) f32
    hb = h.reshape(Bb * T, D).astype(jnp.bfloat16)
    qkv = jnp.dot(hb, wqkv_ref[0], preferred_element_type=jnp.float32)  # (Bb*T, 3D) f32
    qkv = qkv.reshape(Bb, T, 3 * D)

    def split_heads(base):
        # Static lane slices -> per-head (Bb, 1, T, hs) slabs, concatenated along a new head
        # axis and folded into the batch dim: (Bb*H, T, hs).  Only leading-dim reshapes and
        # lane slices/concat (Mosaic-friendly), no sublane<->major transposes.
        slabs = [qkv[:, :, base + i * hs: base + (i + 1) * hs][:, None]
                 for i in range(H)]
        return (jnp.concatenate(slabs, axis=1)
                .reshape(Bb * H, T, hs)
                .astype(jnp.bfloat16))

    q = split_heads(0 * D)
    k = split_heads(1 * D)
    v = split_heads(2 * D)

    # scores: contract last dims directly (no explicit k.T materialization)
    s = jnp.einsum('bqd,bkd->bqk', q, k, preferred_element_type=jnp.float32) * scale
    s = jnp.where(causal, s, -1e30)          # finite mask value; diagonal always kept
    p = _softmax_last(s, approx_recip=True)  # f32, (Bb*H, T, T)
    attn = jnp.einsum('bqk,bkd->bqd', p.astype(jnp.bfloat16), v,
                      preferred_element_type=jnp.float32)               # (Bb*H, T, hs)
    attn = attn.reshape(Bb, H, T, hs)
    attn = jnp.concatenate([attn[:, i] for i in range(H)], axis=-1)     # (Bb, T, D)
    x = x + attn

    # ---------------- feed-forward on LN2(x) ----------------
    h2 = _layernorm(x, ln2w_ref[0], ln2b_ref[0])
    h2b = h2.reshape(Bb * T, D).astype(jnp.bfloat16)
    up = jnp.dot(h2b, wup_ref[0], preferred_element_type=jnp.float32) + bup_ref[0]
    up = jnp.maximum(up, 0.0)
    dn = jnp.dot(up.astype(jnp.bfloat16), wdn_ref[0],
                 preferred_element_type=jnp.float32) + bdn_ref[0]
    # TODO(synk): nn.Dropout(0.2) is identity in eval mode; not applied here.
    x = x + dn.reshape(Bb, T, D)

    x_acc_ref[...] = x

    # ---------------- final LN + LM head + softmax + round (last layer only) ----------------
    @pl.when(l == num_layers - 1)
    def _():
        hf = _layernorm(x, lnfw_ref[...], lnfb_ref[...])
        hfb = hf.reshape(Bb * T, D).astype(jnp.bfloat16)
        logits = jnp.dot(hfb, wout_ref[...],
                         preferred_element_type=jnp.float32) + bout_ref[...]   # (Bb*T, Vp)
        probs = _softmax_last(logits, approx_recip=False)
        out_ref[...] = (jnp.round(probs * 1e4) * 1e-4).reshape(Bb, T, -1)


def gpt_forward(context, params, *, num_blocks, num_heads, block_b=1):
    B, T = context.shape
    V, D = params["tok_emb"].shape
    L = num_blocks
    assert B % block_b == 0
    assert D % num_heads == 0

    # Embedding lookups (gather) done as glue in plain JAX.
    x = params["tok_emb"][context] + params["pos_emb"][:T][None, :, :]
    x = x.astype(jnp.float32)

    # LM head padded to a lane-dense (multiple-of-128) vocab; pad logits forced to -1e30.
    Vp = ((V + 127) // 128) * 128
    w_out = params["w_out"]
    b_out = params["b_out"]
    if Vp != V:
        w_out = jnp.pad(w_out, ((0, 0), (0, Vp - V)))
        b_out = jnp.pad(b_out, ((0, 0), (0, Vp - V)), constant_values=-1e30)

    # bf16 operands for MXU matmuls (cast at the pallas_call boundary).
    wqkv = jnp.concatenate([params["wq"], params["wk"], params["wv"]],
                           axis=-1).astype(jnp.bfloat16)              # (L, D, 3D)
    w_up = params["w_up"].astype(jnp.bfloat16)
    w_dn = params["w_dn"].astype(jnp.bfloat16)
    w_out = w_out.astype(jnp.bfloat16)

    kernel = functools.partial(gpt_kernel, num_heads=num_heads)

    def per_layer(shape):
        # (L, a, b) array -> stream one layer per step along the second grid axis.
        return pl.BlockSpec((1,) + tuple(shape[1:]),
                            lambda b, l: (l,) + (0,) * (len(shape) - 1))

    def invariant(shape):
        return pl.BlockSpec(tuple(shape), lambda b, l: (0,) * len(shape))

    in_specs = [
        pl.BlockSpec((block_b, T, D), lambda b, l: (b, 0, 0)),        # x (per-batch block)
        per_layer(params["ln1_w"].shape), per_layer(params["ln1_b"].shape),
        per_layer(wqkv.shape),
        per_layer(params["ln2_w"].shape), per_layer(params["ln2_b"].shape),
        per_layer(w_up.shape), per_layer(params["b_up"].shape),
        per_layer(w_dn.shape), per_layer(params["b_dn"].shape),
        invariant(params["lnf_w"].shape), invariant(params["lnf_b"].shape),
        invariant(w_out.shape), invariant(b_out.shape),
    ]

    out = pl.pallas_call(
        kernel,
        out_shape=jax.ShapeDtypeStruct((B, T, Vp), jnp.float32),
        grid_spec=pltpu.PrefetchScalarGridSpec(
            num_scalar_prefetch=0,
            grid=(B // block_b, L),
            in_specs=in_specs,
            out_specs=pl.BlockSpec((block_b, T, Vp), lambda b, l: (b, 0, 0)),
            scratch_shapes=[pltpu.VMEM((block_b, T, D), jnp.float32)],
        ),
        compiler_params=pltpu.CompilerParams(
            dimension_semantics=("parallel", "arbitrary")),
    )(
        x,
        params["ln1_w"], params["ln1_b"],
        wqkv,
        params["ln2_w"], params["ln2_b"],
        w_up, params["b_up"],
        w_dn, params["b_dn"],
        params["lnf_w"], params["lnf_b"],
        w_out, b_out,
    )
    return out[:, :, :V]


def init_params(key, vocab_size, context_length, model_dim, num_blocks):
    D, V, L = model_dim, vocab_size, num_blocks
    ks = jax.random.split(key, 8)
    std = 0.02
    params = {
        "tok_emb": std * jax.random.normal(ks[0], (V, D), jnp.float32),
        "pos_emb": std * jax.random.normal(ks[1], (context_length, D), jnp.float32),
        # LayerNorm params stored as (L, 1, D) so they broadcast as 2-D tiles in-kernel.
        "ln1_w": jnp.ones((L, 1, D), jnp.float32),
        "ln1_b": jnp.zeros((L, 1, D), jnp.float32),
        "ln2_w": jnp.ones((L, 1, D), jnp.float32),
        "ln2_b": jnp.zeros((L, 1, D), jnp.float32),
        # Attention projections, pre-transposed as (L, D, D): y = x @ W (fused to QKV in wrapper).
        "wq": std * jax.random.normal(ks[2], (L, D, D), jnp.float32),
        "wk": std * jax.random.normal(ks[3], (L, D, D), jnp.float32),
        "wv": std * jax.random.normal(ks[4], (L, D, D), jnp.float32),
        # MLP
        "w_up": std * jax.random.normal(ks[5], (L, D, 4 * D), jnp.float32),
        "b_up": jnp.zeros((L, 1, 4 * D), jnp.float32),
        "w_dn": std * jax.random.normal(ks[6], (L, 4 * D, D), jnp.float32),
        "b_dn": jnp.zeros((L, 1, D), jnp.float32),
        # Final LN + LM head
        "lnf_w": jnp.ones((1, D), jnp.float32),
        "lnf_b": jnp.zeros((1, D), jnp.float32),
        "w_out": std * jax.random.normal(ks[7], (D, V), jnp.float32),
        "b_out": jnp.zeros((1, V), jnp.float32),
    }
    return params


if __name__ == "__main__":
    vocab_size = 64
    context_length = 8
    model_dim = 32
    num_blocks = 2
    num_heads = 4
    batch = 4          # 2 grid steps of block_b=2 -> parallel axis can split across 2 TCs
    block_b = 2

    key = jax.random.PRNGKey(0)
    k_ctx, k_param = jax.random.split(key)

    params = init_params(k_param, vocab_size, context_length, model_dim, num_blocks)
    context = jax.random.randint(k_ctx, (batch, context_length), 0, vocab_size, dtype=jnp.int32)

    out = gpt_forward(context, params, num_blocks=num_blocks, num_heads=num_heads,
                      block_b=block_b)
    out = jax.block_until_ready(out)

    assert out.shape == (batch, context_length, vocab_size)
    assert bool(jnp.all(jnp.isfinite(out)))
    # probabilities (rounded to 4 decimals) should sum to ~1 per row
    assert bool(jnp.all(jnp.abs(jnp.sum(out, axis=-1) - 1.0) < 1e-2))
    print("KERNEL_OK")
</pallas_src>

<mosaic_0001>
module attributes {stable_mosaic.version = 11 : i64} {
  func.func @gpt_kernel(%arg0: i32, %arg1: i32, %arg2: memref<2x8x32xf32, #tpu.memory_space<vmem>>, %arg3: memref<1x1x32xf32, #tpu.memory_space<vmem>>, %arg4: memref<1x1x32xf32, #tpu.memory_space<vmem>>, %arg5: memref<1x32x96xbf16, #tpu.memory_space<vmem>>, %arg6: memref<1x1x32xf32, #tpu.memory_space<vmem>>, %arg7: memref<1x1x32xf32, #tpu.memory_space<vmem>>, %arg8: memref<1x32x128xbf16, #tpu.memory_space<vmem>>, %arg9: memref<1x1x128xf32, #tpu.memory_space<vmem>>, %arg10: memref<1x128x32xbf16, #tpu.memory_space<vmem>>, %arg11: memref<1x1x32xf32, #tpu.memory_space<vmem>>, %arg12: memref<1x32xf32, #tpu.memory_space<vmem>>, %arg13: memref<1x32xf32, #tpu.memory_space<vmem>>, %arg14: memref<32x128xbf16, #tpu.memory_space<vmem>>, %arg15: memref<1x128xf32, #tpu.memory_space<vmem>>, %arg16: memref<2x8x128xf32, #tpu.memory_space<vmem>>, %arg17: memref<2x8x32xf32, #tpu.memory_space<vmem>>) attributes {dimension_semantics = [#tpu.dimension_semantics<parallel>, #tpu.dimension_semantics<arbitrary>], iteration_bounds = array<i64: 2, 2>, scalar_prefetch = 0 : i64, scratch_operands = 1 : i64, tpu.core_type = #tpu.core_type<tc>, window_params = [{transform_indices = @transform_0, window_bounds = array<i64: 2, 8, 32>}, {transform_indices = @transform_1, window_bounds = array<i64: 1, 1, 32>}, {transform_indices = @transform_2, window_bounds = array<i64: 1, 1, 32>}, {transform_indices = @transform_3, window_bounds = array<i64: 1, 32, 96>}, {transform_indices = @transform_4, window_bounds = array<i64: 1, 1, 32>}, {transform_indices = @transform_5, window_bounds = array<i64: 1, 1, 32>}, {transform_indices = @transform_6, window_bounds = array<i64: 1, 32, 128>}, {transform_indices = @transform_7, window_bounds = array<i64: 1, 1, 128>}, {transform_indices = @transform_8, window_bounds = array<i64: 1, 128, 32>}, {transform_indices = @transform_9, window_bounds = array<i64: 1, 1, 32>}, {pipeline_mode = #tpu.pipeline_mode<synchronous>, transform_indices = @transform_10, window_bounds = array<i64: 1, 32>}, {pipeline_mode = #tpu.pipeline_mode<synchronous>, transform_indices = @transform_11, window_bounds = array<i64: 1, 32>}, {pipeline_mode = #tpu.pipeline_mode<synchronous>, transform_indices = @transform_12, window_bounds = array<i64: 32, 128>}, {pipeline_mode = #tpu.pipeline_mode<synchronous>, transform_indices = @transform_13, window_bounds = array<i64: 1, 128>}, {transform_indices = @transform_14, window_bounds = array<i64: 2, 8, 128>}]} {
    %c0_i32 = arith.constant 0 : i32
    %0 = arith.cmpi eq, %arg1, %c0_i32 : i32
    %1 = arith.extui %0 : i1 to i32
    %c0_i32_0 = arith.constant 0 : i32
    %2 = arith.cmpi ne, %1, %c0_i32_0 : i32
    scf.if %2 {
      %c0_53 = arith.constant 0 : index
      %c0_54 = arith.constant 0 : index
      %c0_55 = arith.constant 0 : index
      %157 = vector.load %arg2[%c0_53, %c0_54, %c0_55] : memref<2x8x32xf32, #tpu.memory_space<vmem>>, vector<2x8x32xf32>
      %c0_56 = arith.constant 0 : index
      %c0_57 = arith.constant 0 : index
      %c0_58 = arith.constant 0 : index
      %158 = vector.load %arg17[%c0_56, %c0_57, %c0_58] : memref<2x8x32xf32, #tpu.memory_space<vmem>>, vector<2x8x32xf32>
      tpu.vector_store %arg17[%c0_56, %c0_57, %c0_58], %157 {strides = array<i32>} : memref<2x8x32xf32, #tpu.memory_space<vmem>>, vector<2x8x32xf32>,
    } else {
    }
    %c0 = arith.constant 0 : index
    %c0_1 = arith.constant 0 : index
    %c0_2 = arith.constant 0 : index
    %3 = vector.load %arg17[%c0, %c0_1, %c0_2] : memref<2x8x32xf32, #tpu.memory_space<vmem>>, vector<2x8x32xf32>
    %4 = tpu.iota {dimensions = array<i32: 0>} : vector<8x8xi32>
    %5 = tpu.iota {dimensions = array<i32: 1>} : vector<8x8xi32>
    %6 = arith.cmpi sge, %4, %5 : vector<8x8xi32>
    %c0_3 = arith.constant 0 : index
    %c0_4 = arith.constant 0 : index
    %c0_5 = arith.constant 0 : index
    %7 = vector.load %arg3[%c0_3, %c0_4, %c0_5] : memref<1x1x32xf32, #tpu.memory_space<vmem>>, vector<1x1x32xf32>
    %8 = vector.shape_cast %7 : vector<1x1x32xf32> to vector<1x32xf32>
    %c0_6 = arith.constant 0 : index
    %c0_7 = arith.constant 0 : index
    %c0_8 = arith.constant 0 : index
    %9 = vector.load %arg4[%c0_6, %c0_7, %c0_8] : memref<1x1x32xf32, #tpu.memory_space<vmem>>, vector<1x1x32xf32>
    %10 = vector.shape_cast %9 : vector<1x1x32xf32> to vector<1x32xf32>
    %cst = arith.constant dense<0.000000e+00> : vector<2x8xf32>
    %11 = vector.multi_reduction <add>, %3, %cst [2] : vector<2x8x32xf32> to vector<2x8xf32>
    %12 = vector.shape_cast %11 : vector<2x8xf32> to vector<2x8x1xf32>
    %cst_9 = arith.constant 3.200000e+01 : f32
    %13 = vector.broadcast %cst_9 : f32 to vector<2x8x1xf32>
    %14 = arith.divf %12, %13 : vector<2x8x1xf32>
    %15 = vector.broadcast %14 : vector<2x8x1xf32> to vector<2x8x32xf32>
    %16 = arith.subf %3, %15 : vector<2x8x32xf32>
    %17 = arith.mulf %16, %16 : vector<2x8x32xf32>
    %cst_10 = arith.constant dense<0.000000e+00> : vector<2x8xf32>
    %18 = vector.multi_reduction <add>, %17, %cst_10 [2] : vector<2x8x32xf32> to vector<2x8xf32>
    %19 = vector.shape_cast %18 : vector<2x8xf32> to vector<2x8x1xf32>
    %cst_11 = arith.constant 3.200000e+01 : f32
    %20 = vector.broadcast %cst_11 : f32 to vector<2x8x1xf32>
    %21 = arith.divf %19, %20 : vector<2x8x1xf32>
    %22 = vector.broadcast %14 : vector<2x8x1xf32> to vector<2x8x32xf32>
    %23 = arith.subf %3, %22 : vector<2x8x32xf32>
    %cst_12 = arith.constant 9.99999974E-6 : f32
    %24 = vector.broadcast %cst_12 : f32 to vector<2x8x1xf32>
    %25 = arith.addf %21, %24 : vector<2x8x1xf32>
    %26 = math.rsqrt %25 : vector<2x8x1xf32>
    %27 = vector.broadcast %26 : vector<2x8x1xf32> to vector<2x8x32xf32>
    %28 = arith.mulf %23, %27 : vector<2x8x32xf32>
    %29 = vector.shape_cast %8 : vector<1x32xf32> to vector<1x1x32xf32>
    %30 = vector.broadcast %29 : vector<1x1x32xf32> to vector<2x8x32xf32>
    %31 = arith.mulf %28, %30 : vector<2x8x32xf32>
    %32 = vector.shape_cast %10 : vector<1x32xf32> to vector<1x1x32xf32>
    %33 = vector.broadcast %32 : vector<1x1x32xf32> to vector<2x8x32xf32>
    %34 = arith.addf %31, %33 : vector<2x8x32xf32>
    %35 = vector.shape_cast %34 : vector<2x8x32xf32> to vector<16x32xf32>
    %36 = arith.truncf %35 : vector<16x32xf32> to vector<16x32xbf16>
    %c0_13 = arith.constant 0 : index
    %c0_14 = arith.constant 0 : index
    %c0_15 = arith.constant 0 : index
    %37 = vector.load %arg5[%c0_13, %c0_14, %c0_15] : memref<1x32x96xbf16, #tpu.memory_space<vmem>>, vector<1x32x96xbf16>
    %38 = vector.shape_cast %37 : vector<1x32x96xbf16> to vector<32x96xbf16>
    %cst_16 = arith.constant dense<0.000000e+00> : vector<16x96xf32>
    %39 = tpu.matmul %36, %38, %cst_16 {dimension_numbers = #tpu.dot_dimension_numbers<[1], [0], [0], [1], [0, 0, 1, 1], [], []>} : vector<16x32xbf16>, vector<32x96xbf16>, vector<16x96xf32> -> vector<16x96xf32>
    %40 = vector.shape_cast %39 : vector<16x96xf32> to vector<2x8x96xf32>
    %41 = vector.extract_strided_slice %40 {offsets = [0, 0, 0], sizes = [2, 8, 8], strides = [1, 1, 1]} : vector<2x8x96xf32> to vector<2x8x8xf32>
    %42 = vector.shape_cast %41 : vector<2x8x8xf32> to vector<2x1x8x8xf32>
    %43 = vector.extract_strided_slice %40 {offsets = [0, 0, 8], sizes = [2, 8, 8], strides = [1, 1, 1]} : vector<2x8x96xf32> to vector<2x8x8xf32>
    %44 = vector.shape_cast %43 : vector<2x8x8xf32> to vector<2x1x8x8xf32>
    %45 = vector.extract_strided_slice %40 {offsets = [0, 0, 16], sizes = [2, 8, 8], strides = [1, 1, 1]} : vector<2x8x96xf32> to vector<2x8x8xf32>
    %46 = vector.shape_cast %45 : vector<2x8x8xf32> to vector<2x1x8x8xf32>
    %47 = vector.extract_strided_slice %40 {offsets = [0, 0, 24], sizes = [2, 8, 8], strides = [1, 1, 1]} : vector<2x8x96xf32> to vector<2x8x8xf32>
    %48 = vector.shape_cast %47 : vector<2x8x8xf32> to vector<2x1x8x8xf32>
    %49 = tpu.concatenate %42, %44, %46, %48 in 1 : vector<2x1x8x8xf32>, vector<2x1x8x8xf32>, vector<2x1x8x8xf32>, vector<2x1x8x8xf32> -> vector<2x4x8x8xf32>
    %50 = vector.shape_cast %49 : vector<2x4x8x8xf32> to vector<8x8x8xf32>
    %51 = arith.truncf %50 : vector<8x8x8xf32> to vector<8x8x8xbf16>
    %52 = vector.extract_strided_slice %40 {offsets = [0, 0, 32], sizes = [2, 8, 8], strides = [1, 1, 1]} : vector<2x8x96xf32> to vector<2x8x8xf32>
    %53 = vector.shape_cast %52 : vector<2x8x8xf32> to vector<2x1x8x8xf32>
    %54 = vector.extract_strided_slice %40 {offsets = [0, 0, 40], sizes = [2, 8, 8], strides = [1, 1, 1]} : vector<2x8x96xf32> to vector<2x8x8xf32>
    %55 = vector.shape_cast %54 : vector<2x8x8xf32> to vector<2x1x8x8xf32>
    %56 = vector.extract_strided_slice %40 {offsets = [0, 0, 48], sizes = [2, 8, 8], strides = [1, 1, 1]} : vector<2x8x96xf32> to vector<2x8x8xf32>
    %57 = vector.shape_cast %56 : vector<2x8x8xf32> to vector<2x1x8x8xf32>
    %58 = vector.extract_strided_slice %40 {offsets = [0, 0, 56], sizes = [2, 8, 8], strides = [1, 1, 1]} : vector<2x8x96xf32> to vector<2x8x8xf32>
    %59 = vector.shape_cast %58 : vector<2x8x8xf32> to vector<2x1x8x8xf32>
    %60 = tpu.concatenate %53, %55, %57, %59 in 1 : vector<2x1x8x8xf32>, vector<2x1x8x8xf32>, vector<2x1x8x8xf32>, vector<2x1x8x8xf32> -> vector<2x4x8x8xf32>
    %61 = vector.shape_cast %60 : vector<2x4x8x8xf32> to vector<8x8x8xf32>
    %62 = arith.truncf %61 : vector<8x8x8xf32> to vector<8x8x8xbf16>
    %63 = vector.extract_strided_slice %40 {offsets = [0, 0, 64], sizes = [2, 8, 8], strides = [1, 1, 1]} : vector<2x8x96xf32> to vector<2x8x8xf32>
    %64 = vector.shape_cast %63 : vector<2x8x8xf32> to vector<2x1x8x8xf32>
    %65 = vector.extract_strided_slice %40 {offsets = [0, 0, 72], sizes = [2, 8, 8], strides = [1, 1, 1]} : vector<2x8x96xf32> to vector<2x8x8xf32>
    %66 = vector.shape_cast %65 : vector<2x8x8xf32> to vector<2x1x8x8xf32>
    %67 = vector.extract_strided_slice %40 {offsets = [0, 0, 80], sizes = [2, 8, 8], strides = [1, 1, 1]} : vector<2x8x96xf32> to vector<2x8x8xf32>
    %68 = vector.shape_cast %67 : vector<2x8x8xf32> to vector<2x1x8x8xf32>
    %69 = vector.extract_strided_slice %40 {offsets = [0, 0, 88], sizes = [2, 8, 8], strides = [1, 1, 1]} : vector<2x8x96xf32> to vector<2x8x8xf32>
    %70 = vector.shape_cast %69 : vector<2x8x8xf32> to vector<2x1x8x8xf32>
    %71 = tpu.concatenate %64, %66, %68, %70 in 1 : vector<2x1x8x8xf32>, vector<2x1x8x8xf32>, vector<2x1x8x8xf32>, vector<2x1x8x8xf32> -> vector<2x4x8x8xf32>
    %72 = vector.shape_cast %71 : vector<2x4x8x8xf32> to vector<8x8x8xf32>
    %73 = arith.truncf %72 : vector<8x8x8xf32> to vector<8x8x8xbf16>
    "tpu.trace_start"() <{level = 10 : i32, message = "bqd,bkd->bqk"}> : () -> ()
    %cst_17 = arith.constant dense<0.000000e+00> : vector<8x8x8xf32>
    %74 = tpu.matmul %51, %62, %cst_17 {dimension_numbers = #tpu.dot_dimension_numbers<[2], [2], [1], [1], [0, 0, 0, 1, 1, 1], [0], [0]>} : vector<8x8x8xbf16>, vector<8x8x8xbf16>, vector<8x8x8xf32> -> vector<8x8x8xf32>
    "tpu.trace_stop"() : () -> ()
    %cst_18 = arith.constant 0.353553385 : f32
    %75 = vector.broadcast %cst_18 : f32 to vector<8x8x8xf32>
    %76 = arith.mulf %74, %75 : vector<8x8x8xf32>
    %cst_19 = arith.constant -1.000000e+30 : f32
    %77 = vector.shape_cast %6 : vector<8x8xi1> to vector<1x8x8xi1>
    %78 = vector.broadcast %77 : vector<1x8x8xi1> to vector<8x8x8xi1>
    %79 = vector.broadcast %cst_19 : f32 to vector<8x8x8xf32>
    %80 = arith.select %78, %76, %79 : vector<8x8x8xi1>, vector<8x8x8xf32>
    %cst_20 = arith.constant dense<0xFF800000> : vector<8x8xf32>
    %81 = vector.multi_reduction <maximumf>, %80, %cst_20 [2] : vector<8x8x8xf32> to vector<8x8xf32>
    %82 = vector.shape_cast %81 : vector<8x8xf32> to vector<8x8x1xf32>
    %83 = vector.broadcast %82 : vector<8x8x1xf32> to vector<8x8x8xf32>
    %84 = arith.subf %80, %83 : vector<8x8x8xf32>
    %85 = math.exp %84 : vector<8x8x8xf32>
    %cst_21 = arith.constant dense<0.000000e+00> : vector<8x8xf32>
    %86 = vector.multi_reduction <add>, %85, %cst_21 [2] : vector<8x8x8xf32> to vector<8x8xf32>
    %87 = vector.shape_cast %86 : vector<8x8xf32> to vector<8x8x1xf32>
    %88 = tpu.reciprocal %87 {approx = true} : vector<8x8x1xf32> -> vector<8x8x1xf32>
    %89 = vector.broadcast %88 : vector<8x8x1xf32> to vector<8x8x8xf32>
    %90 = arith.mulf %85, %89 : vector<8x8x8xf32>
    %91 = arith.truncf %90 : vector<8x8x8xf32> to vector<8x8x8xbf16>
    "tpu.trace_start"() <{level = 10 : i32, message = "bqk,bkd->bqd"}> : () -> ()
    %cst_22 = arith.constant dense<0.000000e+00> : vector<8x8x8xf32>
    %92 = tpu.matmul %91, %73, %cst_22 {dimension_numbers = #tpu.dot_dimension_numbers<[2], [1], [1], [2], [0, 0, 0, 1, 1, 2], [0], [0]>} : vector<8x8x8xbf16>, vector<8x8x8xbf16>, vector<8x8x8xf32> -> vector<8x8x8xf32>
    "tpu.trace_stop"() : () -> ()
    %93 = vector.shape_cast %92 : vector<8x8x8xf32> to vector<2x4x8x8xf32>
    %94 = vector.extract_strided_slice %93 {offsets = [0, 0, 0, 0], sizes = [2, 1, 8, 8], strides = [1, 1, 1, 1]} : vector<2x4x8x8xf32> to vector<2x1x8x8xf32>
    %95 = vector.shape_cast %94 : vector<2x1x8x8xf32> to vector<2x8x8xf32>
    %96 = vector.extract_strided_slice %93 {offsets = [0, 1, 0, 0], sizes = [2, 1, 8, 8], strides = [1, 1, 1, 1]} : vector<2x4x8x8xf32> to vector<2x1x8x8xf32>
    %97 = vector.shape_cast %96 : vector<2x1x8x8xf32> to vector<2x8x8xf32>
    %98 = vector.extract_strided_slice %93 {offsets = [0, 2, 0, 0], sizes = [2, 1, 8, 8], strides = [1, 1, 1, 1]} : vector<2x4x8x8xf32> to vector<2x1x8x8xf32>
    %99 = vector.shape_cast %98 : vector<2x1x8x8xf32> to vector<2x8x8xf32>
    %100 = vector.extract_strided_slice %93 {offsets = [0, 3, 0, 0], sizes = [2, 1, 8, 8], strides = [1, 1, 1, 1]} : vector<2x4x8x8xf32> to vector<2x1x8x8xf32>
    %101 = vector.shape_cast %100 : vector<2x1x8x8xf32> to vector<2x8x8xf32>
    %102 = tpu.concatenate %95, %97, %99, %101 in 2 : vector<2x8x8xf32>, vector<2x8x8xf32>, vector<2x8x8xf32>, vector<2x8x8xf32> -> vector<2x8x32xf32>
    %103 = arith.addf %3, %102 : vector<2x8x32xf32>
    %c0_23 = arith.constant 0 : index
    %c0_24 = arith.constant 0 : index
    %c0_25 = arith.constant 0 : index
    %104 = vector.load %arg6[%c0_23, %c0_24, %c0_25] : memref<1x1x32xf32, #tpu.memory_space<vmem>>, vector<1x1x32xf32>
    %105 = vector.shape_cast %104 : vector<1x1x32xf32> to vector<1x32xf32>
    %c0_26 = arith.constant 0 : index
    %c0_27 = arith.constant 0 : index
    %c0_28 = arith.constant 0 : index
    %106 = vector.load %arg7[%c0_26, %c0_27, %c0_28] : memref<1x1x32xf32, #tpu.memory_space<vmem>>, vector<1x1x32xf32>
    %107 = vector.shape_cast %106 : vector<1x1x32xf32> to vector<1x32xf32>
    %cst_29 = arith.constant dense<0.000000e+00> : vector<2x8xf32>
    %108 = vector.multi_reduction <add>, %103, %cst_29 [2] : vector<2x8x32xf32> to vector<2x8xf32>
    %109 = vector.shape_cast %108 : vector<2x8xf32> to vector<2x8x1xf32>
    %cst_30 = arith.constant 3.200000e+01 : f32
    %110 = vector.broadcast %cst_30 : f32 to vector<2x8x1xf32>
    %111 = arith.divf %109, %110 : vector<2x8x1xf32>
    %112 = vector.broadcast %111 : vector<2x8x1xf32> to vector<2x8x32xf32>
    %113 = arith.subf %103, %112 : vector<2x8x32xf32>
    %114 = arith.mulf %113, %113 : vector<2x8x32xf32>
    %cst_31 = arith.constant dense<0.000000e+00> : vector<2x8xf32>
    %115 = vector.multi_reduction <add>, %114, %cst_31 [2] : vector<2x8x32xf32> to vector<2x8xf32>
    %116 = vector.shape_cast %115 : vector<2x8xf32> to vector<2x8x1xf32>
    %cst_32 = arith.constant 3.200000e+01 : f32
    %117 = vector.broadcast %cst_32 : f32 to vector<2x8x1xf32>
    %118 = arith.divf %116, %117 : vector<2x8x1xf32>
    %119 = vector.broadcast %111 : vector<2x8x1xf32> to vector<2x8x32xf32>
    %120 = arith.subf %103, %119 : vector<2x8x32xf32>
    %cst_33 = arith.constant 9.99999974E-6 : f32
    %121 = vector.broadcast %cst_33 : f32 to vector<2x8x1xf32>
    %122 = arith.addf %118, %121 : vector<2x8x1xf32>
    %123 = math.rsqrt %122 : vector<2x8x1xf32>
    %124 = vector.broadcast %123 : vector<2x8x1xf32> to vector<2x8x32xf32>
    %125 = arith.mulf %120, %124 : vector<2x8x32xf32>
    %126 = vector.shape_cast %105 : vector<1x32xf32> to vector<1x1x32xf32>
    %127 = vector.broadcast %126 : vector<1x1x32xf32> to vector<2x8x32xf32>
    %128 = arith.mulf %125, %127 : vector<2x8x32xf32>
    %129 = vector.shape_cast %107 : vector<1x32xf32> to vector<1x1x32xf32>
    %130 = vector.broadcast %129 : vector<1x1x32xf32> to vector<2x8x32xf32>
    %131 = arith.addf %128, %130 : vector<2x8x32xf32>
    %132 = vector.shape_cast %131 : vector<2x8x32xf32> to vector<16x32xf32>
    %133 = arith.truncf %132 : vector<16x32xf32> to vector<16x32xbf16>
    %c0_34 = arith.constant 0 : index
    %c0_35 = arith.constant 0 : index
    %c0_36 = arith.constant 0 : index
    %134 = vector.load %arg8[%c0_34, %c0_35, %c0_36] : memref<1x32x128xbf16, #tpu.memory_space<vmem>>, vector<1x32x128xbf16>
    %135 = vector.shape_cast %134 : vector<1x32x128xbf16> to vector<32x128xbf16>
    %cst_37 = arith.constant dense<0.000000e+00> : vector<16x128xf32>
    %136 = tpu.matmul %133, %135, %cst_37 {dimension_numbers = #tpu.dot_dimension_numbers<[1], [0], [0], [1], [0, 0, 1, 1], [], []>} : vector<16x32xbf16>, vector<32x128xbf16>, vector<16x128xf32> -> vector<16x128xf32>
    %c0_38 = arith.constant 0 : index
    %c0_39 = arith.constant 0 : index
    %c0_40 = arith.constant 0 : index
    %137 = vector.load %arg9[%c0_38, %c0_39, %c0_40] : memref<1x1x128xf32, #tpu.memory_space<vmem>>, vector<1x1x128xf32>
    %138 = vector.shape_cast %137 : vector<1x1x128xf32> to vector<1x128xf32>
    %139 = vector.broadcast %138 : vector<1x128xf32> to vector<16x128xf32>
    %140 = arith.addf %136, %139 : vector<16x128xf32>
    %cst_41 = arith.constant 0.000000e+00 : f32
    %141 = vector.broadcast %cst_41 : f32 to vector<16x128xf32>
    %142 = arith.maximumf %140, %141 : vector<16x128xf32>
    %143 = arith.truncf %142 : vector<16x128xf32> to vector<16x128xbf16>
    %c0_42 = arith.constant 0 : index
    %c0_43 = arith.constant 0 : index
    %c0_44 = arith.constant 0 : index
    %144 = vector.load %arg10[%c0_42, %c0_43, %c0_44] : memref<1x128x32xbf16, #tpu.memory_space<vmem>>, vector<1x128x32xbf16>
    %145 = vector.shape_cast %144 : vector<1x128x32xbf16> to vector<128x32xbf16>
    %cst_45 = arith.constant dense<0.000000e+00> : vector<16x32xf32>
    %146 = tpu.matmul %143, %145, %cst_45 {dimension_numbers = #tpu.dot_dimension_numbers<[1], [0], [0], [1], [0, 0, 1, 1], [], []>} : vector<16x128xbf16>, vector<128x32xbf16>, vector<16x32xf32> -> vector<16x32xf32>
    %c0_46 = arith.constant 0 : index
    %c0_47 = arith.constant 0 : index
    %c0_48 = arith.constant 0 : index
    %147 = vector.load %arg11[%c0_46, %c0_47, %c0_48] : memref<1x1x32xf32, #tpu.memory_space<vmem>>, vector<1x1x32xf32>
    %148 = vector.shape_cast %147 : vector<1x1x32xf32> to vector<1x32xf32>
    %149 = vector.broadcast %148 : vector<1x32xf32> to vector<16x32xf32>
    %150 = arith.addf %146, %149 : vector<16x32xf32>
    %151 = vector.shape_cast %150 : vector<16x32xf32> to vector<2x8x32xf32>
    %152 = arith.addf %103, %151 : vector<2x8x32xf32>
    %c0_49 = arith.constant 0 : index
    %c0_50 = arith.constant 0 : index
    %c0_51 = arith.constant 0 : index
    %153 = vector.load %arg17[%c0_49, %c0_50, %c0_51] : memref<2x8x32xf32, #tpu.memory_space<vmem>>, vector<2x8x32xf32>
    tpu.vector_store %arg17[%c0_49, %c0_50, %c0_51], %152 {strides = array<i32>} : memref<2x8x32xf32, #tpu.memory_space<vmem>>, vector<2x8x32xf32>,
    %c1_i32 = arith.constant 1 : i32
    %154 = arith.cmpi eq, %arg1, %c1_i32 : i32
    %155 = arith.extui %154 : i1 to i32
    %c0_i32_52 = arith.constant 0 : i32
    %156 = arith.cmpi ne, %155, %c0_i32_52 : i32
    scf.if %156 {
      %c0_53 = arith.constant 0 : index
      %c0_54 = arith.constant 0 : index
      %157 = vector.load %arg12[%c0_53, %c0_54] : memref<1x32xf32, #tpu.memory_space<vmem>>, vector<1x32xf32>
      %c0_55 = arith.constant 0 : index
      %c0_56 = arith.constant 0 : index
      %158 = vector.load %arg13[%c0_55, %c0_56] : memref<1x32xf32, #tpu.memory_space<vmem>>, vector<1x32xf32>
      %cst_57 = arith.constant dense<0.000000e+00> : vector<2x8xf32>
      %159 = vector.multi_reduction <add>, %152, %cst_57 [2] : vector<2x8x32xf32> to vector<2x8xf32>
      %160 = vector.shape_cast %159 : vector<2x8xf32> to vector<2x8x1xf32>
      %cst_58 = arith.constant 3.200000e+01 : f32
      %161 = vector.broadcast %cst_58 : f32 to vector<2x8x1xf32>
      %162 = arith.divf %160, %161 : vector<2x8x1xf32>
      %163 = vector.broadcast %162 : vector<2x8x1xf32> to vector<2x8x32xf32>
      %164 = arith.subf %152, %163 : vector<2x8x32xf32>
      %165 = arith.mulf %164, %164 : vector<2x8x32xf32>
      %cst_59 = arith.constant dense<0.000000e+00> : vector<2x8xf32>
      %166 = vector.multi_reduction <add>, %165, %cst_59 [2] : vector<2x8x32xf32> to vector<2x8xf32>
      %167 = vector.shape_cast %166 : vector<2x8xf32> to vector<2x8x1xf32>
      %cst_60 = arith.constant 3.200000e+01 : f32
      %168 = vector.broadcast %cst_60 : f32 to vector<2x8x1xf32>
      %169 = arith.divf %167, %168 : vector<2x8x1xf32>
      %170 = vector.broadcast %162 : vector<2x8x1xf32> to vector<2x8x32xf32>
      %171 = arith.subf %152, %170 : vector<2x8x32xf32>
      %cst_61 = arith.constant 9.99999974E-6 : f32
      %172 = vector.broadcast %cst_61 : f32 to vector<2x8x1xf32>
      %173 = arith.addf %169, %172 : vector<2x8x1xf32>
      %174 = math.rsqrt %173 : vector<2x8x1xf32>
      %175 = vector.broadcast %174 : vector<2x8x1xf32> to vector<2x8x32xf32>
      %176 = arith.mulf %171, %175 : vector<2x8x32xf32>
      %177 = vector.shape_cast %157 : vector<1x32xf32> to vector<1x1x32xf32>
      %178 = vector.broadcast %177 : vector<1x1x32xf32> to vector<2x8x32xf32>
      %179 = arith.mulf %176, %178 : vector<2x8x32xf32>
      %180 = vector.shape_cast %158 : vector<1x32xf32> to vector<1x1x32xf32>
      %181 = vector.broadcast %180 : vector<1x1x32xf32> to vector<2x8x32xf32>
      %182 = arith.addf %179, %181 : vector<2x8x32xf32>
      %183 = vector.shape_cast %182 : vector<2x8x32xf32> to vector<16x32xf32>
      %184 = arith.truncf %183 : vector<16x32xf32> to vector<16x32xbf16>
      %c0_62 = arith.constant 0 : index
      %c0_63 = arith.constant 0 : index
      %185 = vector.load %arg14[%c0_62, %c0_63] : memref<32x128xbf16, #tpu.memory_space<vmem>>, vector<32x128xbf16>
      %cst_64 = arith.constant dense<0.000000e+00> : vector<16x128xf32>
      %186 = tpu.matmul %184, %185, %cst_64 {dimension_numbers = #tpu.dot_dimension_numbers<[1], [0], [0], [1], [0, 0, 1, 1], [], []>} : vector<16x32xbf16>, vector<32x128xbf16>, vector<16x128xf32> -> vector<16x128xf32>
      %c0_65 = arith.constant 0 : index
      %c0_66 = arith.constant 0 : index
      %187 = vector.load %arg15[%c0_65, %c0_66] : memref<1x128xf32, #tpu.memory_space<vmem>>, vector<1x128xf32>
      %188 = vector.broadcast %187 : vector<1x128xf32> to vector<16x128xf32>
      %189 = arith.addf %186, %188 : vector<16x128xf32>
      %cst_67 = arith.constant dense<0xFF800000> : vector<16xf32>
      %190 = vector.multi_reduction <maximumf>, %189, %cst_67 [1] : vector<16x128xf32> to vector<16xf32>
      %191 = vector.shape_cast %190 : vector<16xf32> to vector<16x1xf32>
      %192 = vector.broadcast %191 : vector<16x1xf32> to vector<16x128xf32>
      %193 = arith.subf %189, %192 : vector<16x128xf32>
      %194 = math.exp %193 : vector<16x128xf32>
      %cst_68 = arith.constant dense<0.000000e+00> : vector<16xf32>
      %195 = vector.multi_reduction <add>, %194, %cst_68 [1] : vector<16x128xf32> to vector<16xf32>
      %196 = vector.shape_cast %195 : vector<16xf32> to vector<16x1xf32>
      %197 = tpu.reciprocal %196 : vector<16x1xf32> -> vector<16x1xf32>
      %198 = vector.broadcast %197 : vector<16x1xf32> to vector<16x128xf32>
      %199 = arith.mulf %194, %198 : vector<16x128xf32>
      %cst_69 = arith.constant 1.000000e+04 : f32
      %200 = vector.broadcast %cst_69 : f32 to vector<16x128xf32>
      %201 = arith.mulf %199, %200 : vector<16x128xf32>
      %202 = math.roundeven %201 : vector<16x128xf32>
      %cst_70 = arith.constant 9.99999974E-5 : f32
      %203 = vector.broadcast %cst_70 : f32 to vector<16x128xf32>
      %204 = arith.mulf %202, %203 : vector<16x128xf32>
      %205 = vector.shape_cast %204 : vector<16x128xf32> to vector<2x8x128xf32>
      %c0_71 = arith.constant 0 : index
      %c0_72 = arith.constant 0 : index
      %c0_73 = arith.constant 0 : index
      %206 = vector.load %arg16[%c0_71, %c0_72, %c0_73] : memref<2x8x128xf32, #tpu.memory_space<vmem>>, vector<2x8x128xf32>
      tpu.vector_store %arg16[%c0_71, %c0_72, %c0_73], %205 {strides = array<i32>} : memref<2x8x128xf32, #tpu.memory_space<vmem>>, vector<2x8x128xf32>,
    } else {
    }
    return
  }
  func.func @transform_0(%arg0: i32, %arg1: i32) -> (i32, i32, i32) {
    %c0_i32 = arith.constant 0 : i32
    %c0_i32_0 = arith.constant 0 : i32
    %c0_i32_1 = arith.constant 0 : i32
    return %arg0, %c0_i32, %c0_i32_0 : i32, i32, i32
  }
  func.func @transform_1(%arg0: i32, %arg1: i32) -> (i32, i32, i32) {
    %c0_i32 = arith.constant 0 : i32
    %c0_i32_0 = arith.constant 0 : i32
    %c0_i32_1 = arith.constant 0 : i32
    return %arg1, %c0_i32, %c0_i32_0 : i32, i32, i32
  }
  func.func @transform_2(%arg0: i32, %arg1: i32) -> (i32, i32, i32) {
    %c0_i32 = arith.constant 0 : i32
    %c0_i32_0 = arith.constant 0 : i32
    %c0_i32_1 = arith.constant 0 : i32
    return %arg1, %c0_i32, %c0_i32_0 : i32, i32, i32
  }
  func.func @transform_3(%arg0: i32, %arg1: i32) -> (i32, i32, i32) {
    %c0_i32 = arith.constant 0 : i32
    %c0_i32_0 = arith.constant 0 : i32
    %c0_i32_1 = arith.constant 0 : i32
    return %arg1, %c0_i32, %c0_i32_0 : i32, i32, i32
  }
  func.func @transform_4(%arg0: i32, %arg1: i32) -> (i32, i32, i32) {
    %c0_i32 = arith.constant 0 : i32
    %c0_i32_0 = arith.constant 0 : i32
    %c0_i32_1 = arith.constant 0 : i32
    return %arg1, %c0_i32, %c0_i32_0 : i32, i32, i32
  }
  func.func @transform_5(%arg0: i32, %arg1: i32) -> (i32, i32, i32) {
    %c0_i32 = arith.constant 0 : i32
    %c0_i32_0 = arith.constant 0 : i32
    %c0_i32_1 = arith.constant 0 : i32
    return %arg1, %c0_i32, %c0_i32_0 : i32, i32, i32
  }
  func.func @transform_6(%arg0: i32, %arg1: i32) -> (i32, i32, i32) {
    %c0_i32 = arith.constant 0 : i32
    %c0_i32_0 = arith.constant 0 : i32
    %c0_i32_1 = arith.constant 0 : i32
    return %arg1, %c0_i32, %c0_i32_0 : i32, i32, i32
  }
  func.func @transform_7(%arg0: i32, %arg1: i32) -> (i32, i32, i32) {
    %c0_i32 = arith.constant 0 : i32
    %c0_i32_0 = arith.constant 0 : i32
    %c0_i32_1 = arith.constant 0 : i32
    return %arg1, %c0_i32, %c0_i32_0 : i32, i32, i32
  }
  func.func @transform_8(%arg0: i32, %arg1: i32) -> (i32, i32, i32) {
    %c0_i32 = arith.constant 0 : i32
    %c0_i32_0 = arith.constant 0 : i32
    %c0_i32_1 = arith.constant 0 : i32
    return %arg1, %c0_i32, %c0_i32_0 : i32, i32, i32
  }
  func.func @transform_9(%arg0: i32, %arg1: i32) -> (i32, i32, i32) {
    %c0_i32 = arith.constant 0 : i32
    %c0_i32_0 = arith.constant 0 : i32
    %c0_i32_1 = arith.constant 0 : i32
    return %arg1, %c0_i32, %c0_i32_0 : i32, i32, i32
  }
  func.func @transform_10(%arg0: i32, %arg1: i32) -> (i32, i32) {
    %c0_i32 = arith.constant 0 : i32
    %c0_i32_0 = arith.constant 0 : i32
    %c0_i32_1 = arith.constant 0 : i32
    return %c0_i32, %c0_i32_0 : i32, i32
  }
  func.func @transform_11(%arg0: i32, %arg1: i32) -> (i32, i32) {
    %c0_i32 = arith.constant 0 : i32
    %c0_i32_0 = arith.constant 0 : i32
    %c0_i32_1 = arith.constant 0 : i32
    return %c0_i32, %c0_i32_0 : i32, i32
  }
  func.func @transform_12(%arg0: i32, %arg1: i32) -> (i32, i32) {
    %c0_i32 = arith.constant 0 : i32
    %c0_i32_0 = arith.constant 0 : i32
    %c0_i32_1 = arith.constant 0 : i32
    return %c0_i32, %c0_i32_0 : i32, i32
  }
  func.func @transform_13(%arg0: i32, %arg1: i32) -> (i32, i32) {
    %c0_i32 = arith.constant 0 : i32
    %c0_i32_0 = arith.constant 0 : i32
    %c0_i32_1 = arith.constant 0 : i32
    return %c0_i32, %c0_i32_0 : i32, i32
  }
  func.func @transform_14(%arg0: i32, %arg1: i32) -> (i32, i32, i32) {
    %c0_i32 = arith.constant 0 : i32
    %c0_i32_0 = arith.constant 0 : i32
    %c0_i32_1 = arith.constant 0 : i32
    return %arg0, %c0_i32, %c0_i32_0 : i32, i32, i32
  }
}

</mosaic_0001>

<llo_original>
// kernel: tpu_custom_call.1
$region0: #{tpu_custom_call.1}
  #allocation0 [shape = 'u32[]', space=smem, size = 0x4, offset = 0x4, fixed_abs, tag = 'smem constant byte address 0x4 - core index']
  #allocation1 [shape = 'u32[72,128]{1,0:T(1,128)}', space=vmem, size = 0x9000, scoped, tag = 'internal scratch']
  #allocation2 [shape = 'f32[2,8,32]{2,1,0:T(8,128)}', space=vmem, size = 0x2000, scoped, tag = 'scratch operand']
  %s0 = inlined_call_operand.vmem [shape: f32[4,8,32], index: 0, kind: input, shape index: {}]
  %s1 = inlined_call_operand.vmem [shape: f32[2,1,32], index: 1, kind: input, shape index: {}]
  %s2 = inlined_call_operand.vmem [shape: f32[2,1,32], index: 2, kind: input, shape index: {}]
  %s3 = inlined_call_operand.vmem [shape: bf16[2,32,96], index: 3, kind: input, shape index: {}]
  %s4 = inlined_call_operand.vmem [shape: f32[2,1,32], index: 4, kind: input, shape index: {}]
  %s5 = inlined_call_operand.vmem [shape: f32[2,1,32], index: 5, kind: input, shape index: {}]
  %s6 = inlined_call_operand.vmem [shape: bf16[2,32,128], index: 6, kind: input, shape index: {}]
  %s7 = inlined_call_operand.vmem [shape: f32[2,1,128], index: 7, kind: input, shape index: {}]
  %s8 = inlined_call_operand.vmem [shape: bf16[2,128,32], index: 8, kind: input, shape index: {}]
  %s9 = inlined_call_operand.vmem [shape: f32[2,1,32], index: 9, kind: input, shape index: {}]
  %s10 = inlined_call_operand.vmem [shape: f32[1,32], index: 10, kind: input, shape index: {}]
  %s11 = inlined_call_operand.vmem [shape: f32[1,32], index: 11, kind: input, shape index: {}]
  %s12 = inlined_call_operand.vmem [shape: bf16[32,128], index: 12, kind: input, shape index: {}]
  %s13 = inlined_call_operand.vmem [shape: f32[1,128], index: 13, kind: input, shape index: {}]
  %s14 = inlined_call_operand.hbm [shape: f32[4,8,128], index: 14, kind: output, shape index: {}]
  %s15 = sld [smem:[#allocation0]]
  $region97: #{tpu_custom_call.1} parent=0
    _
  %s17 = ssub.s32 1, %s15
  %s18 = scalar_select 0, %s17, %s15
  $region1: #{tpu_custom_call.1} parent=0
    #allocation3 [shape = 'u8[16384]{0}', space=vmem, size = 0x4000, scoped, tag = 'output window, operand 0']
    #allocation4 [shape = 's32[2]{0}', space=sflag, size = 0x8, scoped, tag = 'scoped memory for tpu_custom_call.1']
    %19 = vsyncpa [#allocation4], 0
    %s20 = scalar_lea.sflag [#allocation4], 1
    %21 = vsyncpa %s20, 0
    loop: start=0, step=1, limit=6
    $region2: #{tpu_custom_call.1} parent=1 // loop_pre_header
      _
    $region3: #{tpu_custom_call.1} parent=1 // loop_header
      %s23 = sphi 0, %s27
      %p24 = scmp.ge.s32.totalorder %s23, 6
      %s30 = sphi 0, %s42
      %s31 = sphi 0, %s38
      %s32 = sphi 0, %s30
      %s33 = sphi 0, %s31
      %s34 = sphi 0, %s32
      %s35 = sphi 0, %s33
      %s45 = sphi 0, %s47
      %s48 = sphi 0, %s45
      %s49 = sphi 0, %s48
      %s65 = sphi 0, %s49
      %s71 = sphi 0, %s73
      %s74 = sphi 0, %s71
      %s75 = sphi 0, %s74
      %s91 = sphi 0, %s75
      %s97 = sphi 0, %s99
      %s100 = sphi 0, %s97
      %s101 = sphi 0, %s100
      %s117 = sphi 0, %s101
      %s123 = sphi 0, %s125
      %s126 = sphi 0, %s123
      %s127 = sphi 0, %s126
      %s143 = sphi 0, %s127
      %s149 = sphi 0, %s151
      %s152 = sphi 0, %s149
      %s153 = sphi 0, %s152
      %s169 = sphi 0, %s153
      %s175 = sphi 0, %s177
      %s178 = sphi 0, %s175
      %s179 = sphi 0, %s178
      %s195 = sphi 0, %s179
      %s201 = sphi 0, %s203
      %s204 = sphi 0, %s201
      %s205 = sphi 0, %s204
      %s221 = sphi 0, %s205
      %s227 = sphi 0, %s229
      %s230 = sphi 0, %s227
      %s231 = sphi 0, %s230
      %s247 = sphi 0, %s231
      %s253 = sphi 0, %s255
      %s256 = sphi 0, %s253
      %s257 = sphi 0, %s256
      %s273 = sphi 0, %s257
      %s279 = sphi 0, %s281
      %s282 = sphi 0, %s279
      %s283 = sphi 0, %s282
      %s299 = sphi 0, %s283
      %s303 = sphi 0, %s303
      %s305 = sphi 0, %s303
      %s306 = sphi 0, %s305
      %s320 = sphi 0, %s306
      %s324 = sphi 0, %s324
      %s326 = sphi 0, %s324
      %s327 = sphi 0, %s326
      %s341 = sphi 0, %s327
      %s345 = sphi 0, %s345
      %s347 = sphi 0, %s345
      %s348 = sphi 0, %s347
      %s362 = sphi 0, %s348
      %s366 = sphi 0, %s366
      %s368 = sphi 0, %s366
      %s369 = sphi 0, %s368
      %s383 = sphi 0, %s369
      %s389 = sphi 0, %s391
      %s392 = sphi 0, %s389
      %s393 = sphi 0, %s392
      %s409 = sphi 0, %s393
    $region4: #{tpu_custom_call.1} parent=1 // loop_header_branch
      %26 = sbr.rel (%p24) target = $region8
    $region5: #{tpu_custom_call.1} parent=1 // loop_body
      %s28 = ssub.s32 %s23, 1
      %s29 = ssub.s32 %s23, 2
      %s36 = sadd.s32 1, %s31
      %p37 = scmp.ge.s32.totalorder %s36, 2
      %s38 = scalar_select %p37, 0, %s36
      %s39 = sadd.s32 1, %s30
      %s40 = scalar_select %p37, %s39, %s30
      %p41 = scmp.ge.s32.totalorder %s40, 2
      %s42 = scalar_select %p41, 0, %s40
      %s43 = ssub.s32 %s30, %s42
      %p44 = scmp.eq.s32.totalorder %s43, 0
      %s46 = sadd.s32 %s45, 1
      %s47 = scalar_select %p44, %s45, %s46
      %p50 = pneg %p44
      %p51 = scmp.eq.s32.totalorder %s23, 3
      %p52 = por %p50, %p51
      %p53 = scmp.ne.s32.totalorder %s45, %s48
      %p54 = scmp.eq.s32.totalorder %s23, 0
      %p55 = por %p53, %p54
      %p56 = scmp.ne.s32.totalorder %s45, %s48
      %p57 = scmp.eq.s32.totalorder %s28, 3
      %p58 = por %p56, %p57
      %p59 = scmp.ne.s32.totalorder %s48, %s49
      %p60 = scmp.eq.s32.totalorder %s28, 0
      %p61 = por %p59, %p60
      %p62 = scmp.ne.s32.totalorder %s48, %s49
      %p63 = scmp.eq.s32.totalorder %s29, 3
      %p64 = por %p62, %p63
      %p66 = scmp.ne.s32.totalorder %s49, %s65
      %p67 = scmp.eq.s32.totalorder %s29, 0
      %p68 = por %p66, %p67
      %s69 = ssub.s32 %s31, %s38
      %p70 = scmp.eq.s32.totalorder %s69, 0
      %s72 = sadd.s32 %s71, 1
      %s73 = scalar_select %p70, %s71, %s72
      %p76 = pneg %p70
      %p77 = scmp.eq.s32.totalorder %s23, 3
      %p78 = por %p76, %p77
      %p79 = scmp.ne.s32.totalorder %s71, %s74
      %p80 = scmp.eq.s32.totalorder %s23, 0
      %p81 = por %p79, %p80
      %p82 = scmp.ne.s32.totalorder %s71, %s74
      %p83 = scmp.eq.s32.totalorder %s28, 3
      %p84 = por %p82, %p83
      %p85 = scmp.ne.s32.totalorder %s74, %s75
      %p86 = scmp.eq.s32.totalorder %s28, 0
      %p87 = por %p85, %p86
      %p88 = scmp.ne.s32.totalorder %s74, %s75
      %p89 = scmp.eq.s32.totalorder %s29, 3
      %p90 = por %p88, %p89
      %p92 = scmp.ne.s32.totalorder %s75, %s91
      %p93 = scmp.eq.s32.totalorder %s29, 0
      %p94 = por %p92, %p93
      %s95 = ssub.s32 %s31, %s38
      %p96 = scmp.eq.s32.totalorder %s95, 0
      %s98 = sadd.s32 %s97, 1
      %s99 = scalar_select %p96, %s97, %s98
      %p102 = pneg %p96
      %p103 = scmp.eq.s32.totalorder %s23, 3
      %p104 = por %p102, %p103
      %p105 = scmp.ne.s32.totalorder %s97, %s100
      %p106 = scmp.eq.s32.totalorder %s23, 0
      %p107 = por %p105, %p106
      %p108 = scmp.ne.s32.totalorder %s97, %s100
      %p109 = scmp.eq.s32.totalorder %s28, 3
      %p110 = por %p108, %p109
      %p111 = scmp.ne.s32.totalorder %s100, %s101
      %p112 = scmp.eq.s32.totalorder %s28, 0
      %p113 = por %p111, %p112
      %p114 = scmp.ne.s32.totalorder %s100, %s101
      %p115 = scmp.eq.s32.totalorder %s29, 3
      %p116 = por %p114, %p115
      %p118 = scmp.ne.s32.totalorder %s101, %s117
      %p119 = scmp.eq.s32.totalorder %s29, 0
      %p120 = por %p118, %p119
      %s121 = ssub.s32 %s31, %s38
      %p122 = scmp.eq.s32.totalorder %s121, 0
      %s124 = sadd.s32 %s123, 1
      %s125 = scalar_select %p122, %s123, %s124
      %p128 = pneg %p122
      %p129 = scmp.eq.s32.totalorder %s23, 3
      %p130 = por %p128, %p129
      %p131 = scmp.ne.s32.totalorder %s123, %s126
      %p132 = scmp.eq.s32.totalorder %s23, 0
      %p133 = por %p131, %p132
      %p134 = scmp.ne.s32.totalorder %s123, %s126
      %p135 = scmp.eq.s32.totalorder %s28, 3
      %p136 = por %p134, %p135
      %p137 = scmp.ne.s32.totalorder %s126, %s127
      %p138 = scmp.eq.s32.totalorder %s28, 0
      %p139 = por %p137, %p138
      %p140 = scmp.ne.s32.totalorder %s126, %s127
      %p141 = scmp.eq.s32.totalorder %s29, 3
      %p142 = por %p140, %p141
      %p144 = scmp.ne.s32.totalorder %s127, %s143
      %p145 = scmp.eq.s32.totalorder %s29, 0
      %p146 = por %p144, %p145
      %s147 = ssub.s32 %s31, %s38
      %p148 = scmp.eq.s32.totalorder %s147, 0
      %s150 = sadd.s32 %s149, 1
      %s151 = scalar_select %p148, %s149, %s150
      %p154 = pneg %p148
      %p155 = scmp.eq.s32.totalorder %s23, 3
      %p156 = por %p154, %p155
      %p157 = scmp.ne.s32.totalorder %s149, %s152
      %p158 = scmp.eq.s32.totalorder %s23, 0
      %p159 = por %p157, %p158
      %p160 = scmp.ne.s32.totalorder %s149, %s152
      %p161 = scmp.eq.s32.totalorder %s28, 3
      %p162 = por %p160, %p161
      %p163 = scmp.ne.s32.totalorder %s152, %s153
      %p164 = scmp.eq.s32.totalorder %s28, 0
      %p165 = por %p163, %p164
      %p166 = scmp.ne.s32.totalorder %s152, %s153
      %p167 = scmp.eq.s32.totalorder %s29, 3
      %p168 = por %p166, %p167
      %p170 = scmp.ne.s32.totalorder %s153, %s169
      %p171 = scmp.eq.s32.totalorder %s29, 0
      %p172 = por %p170, %p171
      %s173 = ssub.s32 %s31, %s38
      %p174 = scmp.eq.s32.totalorder %s173, 0
      %s176 = sadd.s32 %s175, 1
      %s177 = scalar_select %p174, %s175, %s176
      %p180 = pneg %p174
      %p181 = scmp.eq.s32.totalorder %s23, 3
      %p182 = por %p180, %p181
      %p183 = scmp.ne.s32.totalorder %s175, %s178
      %p184 = scmp.eq.s32.totalorder %s23, 0
      %p185 = por %p183, %p184
      %p186 = scmp.ne.s32.totalorder %s175, %s178
      %p187 = scmp.eq.s32.totalorder %s28, 3
      %p188 = por %p186, %p187
      %p189 = scmp.ne.s32.totalorder %s178, %s179
      %p190 = scmp.eq.s32.totalorder %s28, 0
      %p191 = por %p189, %p190
      %p192 = scmp.ne.s32.totalorder %s178, %s179
      %p193 = scmp.eq.s32.totalorder %s29, 3
      %p194 = por %p192, %p193
      %p196 = scmp.ne.s32.totalorder %s179, %s195
      %p197 = scmp.eq.s32.totalorder %s29, 0
      %p198 = por %p196, %p197
      %s199 = ssub.s32 %s31, %s38
      %p200 = scmp.eq.s32.totalorder %s199, 0
      %s202 = sadd.s32 %s201, 1
      %s203 = scalar_select %p200, %s201, %s202
      %p206 = pneg %p200
      %p207 = scmp.eq.s32.totalorder %s23, 3
      %p208 = por %p206, %p207
      %p209 = scmp.ne.s32.totalorder %s201, %s204
      %p210 = scmp.eq.s32.totalorder %s23, 0
      %p211 = por %p209, %p210
      %p212 = scmp.ne.s32.totalorder %s201, %s204
      %p213 = scmp.eq.s32.totalorder %s28, 3
      %p214 = por %p212, %p213
      %p215 = scmp.ne.s32.totalorder %s204, %s205
      %p216 = scmp.eq.s32.totalorder %s28, 0
      %p217 = por %p215, %p216
      %p218 = scmp.ne.s32.totalorder %s204, %s205
      %p219 = scmp.eq.s32.totalorder %s29, 3
      %p220 = por %p218, %p219
      %p222 = scmp.ne.s32.totalorder %s205, %s221
      %p223 = scmp.eq.s32.totalorder %s29, 0
      %p224 = por %p222, %p223
      %s225 = ssub.s32 %s31, %s38
      %p226 = scmp.eq.s32.totalorder %s225, 0
      %s228 = sadd.s32 %s227, 1
      %s229 = scalar_select %p226, %s227, %s228
      %p232 = pneg %p226
      %p233 = scmp.eq.s32.totalorder %s23, 3
      %p234 = por %p232, %p233
      %p235 = scmp.ne.s32.totalorder %s227, %s230
      %p236 = scmp.eq.s32.totalorder %s23, 0
      %p237 = por %p235, %p236
      %p238 = scmp.ne.s32.totalorder %s227, %s230
      %p239 = scmp.eq.s32.totalorder %s28, 3
      %p240 = por %p238, %p239
      %p241 = scmp.ne.s32.totalorder %s230, %s231
      %p242 = scmp.eq.s32.totalorder %s28, 0
      %p243 = por %p241, %p242
      %p244 = scmp.ne.s32.totalorder %s230, %s231
      %p245 = scmp.eq.s32.totalorder %s29, 3
      %p246 = por %p244, %p245
      %p248 = scmp.ne.s32.totalorder %s231, %s247
      %p249 = scmp.eq.s32.totalorder %s29, 0
      %p250 = por %p248, %p249
      %s251 = ssub.s32 %s31, %s38
      %p252 = scmp.eq.s32.totalorder %s251, 0
      %s254 = sadd.s32 %s253, 1
      %s255 = scalar_select %p252, %s253, %s254
      %p258 = pneg %p252
      %p259 = scmp.eq.s32.totalorder %s23, 3
      %p260 = por %p258, %p259
      %p261 = scmp.ne.s32.totalorder %s253, %s256
      %p262 = scmp.eq.s32.totalorder %s23, 0
      %p263 = por %p261, %p262
      %p264 = scmp.ne.s32.totalorder %s253, %s256
      %p265 = scmp.eq.s32.totalorder %s28, 3
      %p266 = por %p264, %p265
      %p267 = scmp.ne.s32.totalorder %s256, %s257
      %p268 = scmp.eq.s32.totalorder %s28, 0
      %p269 = por %p267, %p268
      %p270 = scmp.ne.s32.totalorder %s256, %s257
      %p271 = scmp.eq.s32.totalorder %s29, 3
      %p272 = por %p270, %p271
      %p274 = scmp.ne.s32.totalorder %s257, %s273
      %p275 = scmp.eq.s32.totalorder %s29, 0
      %p276 = por %p274, %p275
      %s277 = ssub.s32 %s31, %s38
      %p278 = scmp.eq.s32.totalorder %s277, 0
      %s280 = sadd.s32 %s279, 1
      %s281 = scalar_select %p278, %s279, %s280
      %p284 = pneg %p278
      %p285 = scmp.eq.s32.totalorder %s23, 3
      %p286 = por %p284, %p285
      %p287 = scmp.ne.s32.totalorder %s279, %s282
      %p288 = scmp.eq.s32.totalorder %s23, 0
      %p289 = por %p287, %p288
      %p290 = scmp.ne.s32.totalorder %s279, %s282
      %p291 = scmp.eq.s32.totalorder %s28, 3
      %p292 = por %p290, %p291
      %p293 = scmp.ne.s32.totalorder %s282, %s283
      %p294 = scmp.eq.s32.totalorder %s28, 0
      %p295 = por %p293, %p294
      %p296 = scmp.ne.s32.totalorder %s282, %s283
      %p297 = scmp.eq.s32.totalorder %s29, 3
      %p298 = por %p296, %p297
      %p300 = scmp.ne.s32.totalorder %s283, %s299
      %p301 = scmp.eq.s32.totalorder %s29, 0
      %p302 = por %p300, %p301
      %s304 = sadd.s32 %s303, 1
      %p307 = scmp.eq.s32.totalorder %s23, 3
      %p308 = scmp.ne.s32.totalorder %s303, %s305
      %p309 = scmp.eq.s32.totalorder %s23, 0
      %p310 = por %p308, %p309
      %p311 = scmp.ne.s32.totalorder %s303, %s305
      %p312 = scmp.eq.s32.totalorder %s28, 3
      %p313 = por %p311, %p312
      %p314 = scmp.ne.s32.totalorder %s305, %s306
      %p315 = scmp.eq.s32.totalorder %s28, 0
      %p316 = por %p314, %p315
      %p317 = scmp.ne.s32.totalorder %s305, %s306
      %p318 = scmp.eq.s32.totalorder %s29, 3
      %p319 = por %p317, %p318
      %p321 = scmp.ne.s32.totalorder %s306, %s320
      %p322 = scmp.eq.s32.totalorder %s29, 0
      %p323 = por %p321, %p322
      %s325 = sadd.s32 %s324, 1
      %p328 = scmp.eq.s32.totalorder %s23, 3
      %p329 = scmp.ne.s32.totalorder %s324, %s326
      %p330 = scmp.eq.s32.totalorder %s23, 0
      %p331 = por %p329, %p330
      %p332 = scmp.ne.s32.totalorder %s324, %s326
      %p333 = scmp.eq.s32.totalorder %s28, 3
      %p334 = por %p332, %p333
      %p335 = scmp.ne.s32.totalorder %s326, %s327
      %p336 = scmp.eq.s32.totalorder %s28, 0
      %p337 = por %p335, %p336
      %p338 = scmp.ne.s32.totalorder %s326, %s327
      %p339 = scmp.eq.s32.totalorder %s29, 3
      %p340 = por %p338, %p339
      %p342 = scmp.ne.s32.totalorder %s327, %s341
      %p343 = scmp.eq.s32.totalorder %s29, 0
      %p344 = por %p342, %p343
      %s346 = sadd.s32 %s345, 1
      %p349 = scmp.eq.s32.totalorder %s23, 3
      %p350 = scmp.ne.s32.totalorder %s345, %s347
      %p351 = scmp.eq.s32.totalorder %s23, 0
      %p352 = por %p350, %p351
      %p353 = scmp.ne.s32.totalorder %s345, %s347
      %p354 = scmp.eq.s32.totalorder %s28, 3
      %p355 = por %p353, %p354
      %p356 = scmp.ne.s32.totalorder %s347, %s348
      %p357 = scmp.eq.s32.totalorder %s28, 0
      %p358 = por %p356, %p357
      %p359 = scmp.ne.s32.totalorder %s347, %s348
      %p360 = scmp.eq.s32.totalorder %s29, 3
      %p361 = por %p359, %p360
      %p363 = scmp.ne.s32.totalorder %s348, %s362
      %p364 = scmp.eq.s32.totalorder %s29, 0
      %p365 = por %p363, %p364
      %s367 = sadd.s32 %s366, 1
      %p370 = scmp.eq.s32.totalorder %s23, 3
      %p371 = scmp.ne.s32.totalorder %s366, %s368
      %p372 = scmp.eq.s32.totalorder %s23, 0
      %p373 = por %p371, %p372
      %p374 = scmp.ne.s32.totalorder %s366, %s368
      %p375 = scmp.eq.s32.totalorder %s28, 3
      %p376 = por %p374, %p375
      %p377 = scmp.ne.s32.totalorder %s368, %s369
      %p378 = scmp.eq.s32.totalorder %s28, 0
      %p379 = por %p377, %p378
      %p380 = scmp.ne.s32.totalorder %s368, %s369
      %p381 = scmp.eq.s32.totalorder %s29, 3
      %p382 = por %p380, %p381
      %p384 = scmp.ne.s32.totalorder %s369, %s383
      %p385 = scmp.eq.s32.totalorder %s29, 0
      %p386 = por %p384, %p385
      %s387 = ssub.s32 %s30, %s42
      %p388 = scmp.eq.s32.totalorder %s387, 0
      %s390 = sadd.s32 %s389, 1
      %s391 = scalar_select %p388, %s389, %s390
      %p394 = pneg %p388
      %p395 = scmp.eq.s32.totalorder %s23, 3
      %p396 = por %p394, %p395
      %p397 = scmp.ne.s32.totalorder %s389, %s392
      %p398 = scmp.eq.s32.totalorder %s23, 0
      %p399 = por %p397, %p398
      %p400 = scmp.ne.s32.totalorder %s389, %s392
      %p401 = scmp.eq.s32.totalorder %s28, 3
      %p402 = por %p400, %p401
      %p403 = scmp.ne.s32.totalorder %s392, %s393
      %p404 = scmp.eq.s32.totalorder %s28, 0
      %p405 = por %p403, %p404
      %p406 = scmp.ne.s32.totalorder %s392, %s393
      %p407 = scmp.eq.s32.totalorder %s29, 3
      %p408 = por %p406, %p407
      %p410 = scmp.ne.s32.totalorder %s393, %s409
      %p411 = scmp.eq.s32.totalorder %s29, 0
      %p412 = por %p410, %p411
      %p413 = scmp.le.s32.totalorder 1, %s23
      %p414 = scmp.lt.s32.totalorder %s23, 5
      %p415 = pnand %p413, %p414
      %p416 = pneg %p415
      // Predicated region
      $region9: #{tpu_custom_call.1} parent=5 // pred_check
        _
      $region10: #{tpu_custom_call.1} parent=5 // pred_check_branch
        %418 = sbr.rel (%p415) target = $region12
      $region11: #{tpu_custom_call.1} parent=5 // pred_region
        %s419 = ssub.s32 %s23, 1
        // Predicated region
        $region13: #{tpu_custom_call.1} parent=11 // pred_check
          %p420 = pneg %p316
        $region14: #{tpu_custom_call.1} parent=11 // pred_check_branch
          %422 = sbr.rel (%p420) target = $region16
        $region15: #{tpu_custom_call.1} parent=11 // pred_region
          _
        $region16: #{tpu_custom_call.1} parent=11 // pred_fallthru
          _
        // Predicated region
        $region17: #{tpu_custom_call.1} parent=11 // pred_check
          %p423 = pneg %p337
        $region18: #{tpu_custom_call.1} parent=11 // pred_check_branch
          %425 = sbr.rel (%p423) target = $region20
        $region19: #{tpu_custom_call.1} parent=11 // pred_region
          _
        $region20: #{tpu_custom_call.1} parent=11 // pred_fallthru
          _
        // Predicated region
        $region21: #{tpu_custom_call.1} parent=11 // pred_check
          %p426 = pneg %p358
        $region22: #{tpu_custom_call.1} parent=11 // pred_check_branch
          %428 = sbr.rel (%p426) target = $region24
        $region23: #{tpu_custom_call.1} parent=11 // pred_region
          _
        $region24: #{tpu_custom_call.1} parent=11 // pred_fallthru
          _
        // Predicated region
        $region25: #{tpu_custom_call.1} parent=11 // pred_check
          %p429 = pneg %p379
        $region26: #{tpu_custom_call.1} parent=11 // pred_check_branch
          %431 = sbr.rel (%p429) target = $region28
        $region27: #{tpu_custom_call.1} parent=11 // pred_region
          _
        $region28: #{tpu_custom_call.1} parent=11 // pred_fallthru
          _
      $region12: #{tpu_custom_call.1} parent=5 // pred_fallthru
        _
      %p432 = scmp.lt.s32.totalorder %s23, 4
      // Predicated region
      $region29: #{tpu_custom_call.1} parent=5 // pred_check
        %p433 = pneg %p432
      $region30: #{tpu_custom_call.1} parent=5 // pred_check_branch
        %435 = sbr.rel (%p433) target = $region32
      $region31: #{tpu_custom_call.1} parent=5 // pred_region
        // Predicated region
        $region33: #{tpu_custom_call.1} parent=31 // pred_check
          %p436 = pneg %p55
        $region34: #{tpu_custom_call.1} parent=31 // pred_check_branch
          %438 = sbr.rel (%p436) target = $region36
        $region35: #{tpu_custom_call.1} parent=31 // pred_region
          %s439 = smul.u32 2, %s30
          %p440 = scmp.lt.s32.totalorder %s439, 3
          %s441 = scalar_select %p440, %s439, 3
          %s442 = smul.addr %s441, 8
          %s443 = scalar_lea.vmem %s0, %s442
          %s444 = smul.u32 2, %s30
        $region36: #{tpu_custom_call.1} parent=31 // pred_fallthru
          _
        // Predicated region
        $region37: #{tpu_custom_call.1} parent=31 // pred_check
          %p445 = pneg %p81
        $region38: #{tpu_custom_call.1} parent=31 // pred_check_branch
          %447 = sbr.rel (%p445) target = $region40
        $region39: #{tpu_custom_call.1} parent=31 // pred_region
          %p448 = scmp.lt.s32.totalorder %s31, 1
          %s449 = scalar_select %p448, %s31, 1
          %s450 = scalar_lea.vmem %s1, %s449
        $region40: #{tpu_custom_call.1} parent=31 // pred_fallthru
          _
        // Predicated region
        $region41: #{tpu_custom_call.1} parent=31 // pred_check
          %p451 = pneg %p107
        $region42: #{tpu_custom_call.1} parent=31 // pred_check_branch
          %453 = sbr.rel (%p451) target = $region44
        $region43: #{tpu_custom_call.1} parent=31 // pred_region
          %p454 = scmp.lt.s32.totalorder %s31, 1
          %s455 = scalar_select %p454, %s31, 1
          %s456 = scalar_lea.vmem %s2, %s455
        $region44: #{tpu_custom_call.1} parent=31 // pred_fallthru
          _
        // Predicated region
        $region45: #{tpu_custom_call.1} parent=31 // pred_check
          %p457 = pneg %p133
        $region46: #{tpu_custom_call.1} parent=31 // pred_check_branch
          %459 = sbr.rel (%p457) target = $region48
        $region47: #{tpu_custom_call.1} parent=31 // pred_region
          %p460 = scmp.lt.s32.totalorder %s31, 1
          %s461 = scalar_select %p460, %s31, 1
          %s462 = smul.addr %s461, 4
          %s463 = smul.addr %s462, 4
          %s464 = scalar_lea.vmem %s3, %s463
        $region48: #{tpu_custom_call.1} parent=31 // pred_fallthru
          _
        // Predicated region
        $region49: #{tpu_custom_call.1} parent=31 // pred_check
          %p465 = pneg %p159
        $region50: #{tpu_custom_call.1} parent=31 // pred_check_branch
          %467 = sbr.rel (%p465) target = $region52
        $region51: #{tpu_custom_call.1} parent=31 // pred_region
          %p468 = scmp.lt.s32.totalorder %s31, 1
          %s469 = scalar_select %p468, %s31, 1
          %s470 = scalar_lea.vmem %s4, %s469
        $region52: #{tpu_custom_call.1} parent=31 // pred_fallthru
          _
        // Predicated region
        $region53: #{tpu_custom_call.1} parent=31 // pred_check
          %p471 = pneg %p185
        $region54: #{tpu_custom_call.1} parent=31 // pred_check_branch
          %473 = sbr.rel (%p471) target = $region56
        $region55: #{tpu_custom_call.1} parent=31 // pred_region
          %p474 = scmp.lt.s32.totalorder %s31, 1
          %s475 = scalar_select %p474, %s31, 1
          %s476 = scalar_lea.vmem %s5, %s475
        $region56: #{tpu_custom_call.1} parent=31 // pred_fallthru
          _
        // Predicated region
        $region57: #{tpu_custom_call.1} parent=31 // pred_check
          %p477 = pneg %p211
        $region58: #{tpu_custom_call.1} parent=31 // pred_check_branch
          %479 = sbr.rel (%p477) target = $region60
        $region59: #{tpu_custom_call.1} parent=31 // pred_region
          %p480 = scmp.lt.s32.totalorder %s31, 1
          %s481 = scalar_select %p480, %s31, 1
          %s482 = smul.addr %s481, 4
          %s483 = smul.addr %s482, 4
          %s484 = scalar_lea.vmem %s6, %s483
        $region60: #{tpu_custom_call.1} parent=31 // pred_fallthru
          _
        // Predicated region
        $region61: #{tpu_custom_call.1} parent=31 // pred_check
          %p485 = pneg %p237
        $region62: #{tpu_custom_call.1} parent=31 // pred_check_branch
          %487 = sbr.rel (%p485) target = $region64
        $region63: #{tpu_custom_call.1} parent=31 // pred_region
          %p488 = scmp.lt.s32.totalorder %s31, 1
          %s489 = scalar_select %p488, %s31, 1
          %s490 = scalar_lea.vmem %s7, %s489
        $region64: #{tpu_custom_call.1} parent=31 // pred_fallthru
          _
        // Predicated region
        $region65: #{tpu_custom_call.1} parent=31 // pred_check
          %p491 = pneg %p263
        $region66: #{tpu_custom_call.1} parent=31 // pred_check_branch
          %493 = sbr.rel (%p491) target = $region68
        $region67: #{tpu_custom_call.1} parent=31 // pred_region
          %p494 = scmp.lt.s32.totalorder %s31, 1
          %s495 = scalar_select %p494, %s31, 1
          %s496 = smul.addr %s495, 16
          %s497 = smul.addr %s496, 4
          %s498 = scalar_lea.vmem %s8, %s497
        $region68: #{tpu_custom_call.1} parent=31 // pred_fallthru
          _
        // Predicated region
        $region69: #{tpu_custom_call.1} parent=31 // pred_check
          %p499 = pneg %p289
        $region70: #{tpu_custom_call.1} parent=31 // pred_check_branch
          %501 = sbr.rel (%p499) target = $region72
        $region71: #{tpu_custom_call.1} parent=31 // pred_region
          %p502 = scmp.lt.s32.totalorder %s31, 1
          %s503 = scalar_select %p502, %s31, 1
          %s504 = scalar_lea.vmem %s9, %s503
        $region72: #{tpu_custom_call.1} parent=31 // pred_fallthru
          _
      $region32: #{tpu_custom_call.1} parent=5 // pred_fallthru
        _
      %p505 = scmp.le.s32.totalorder 1, %s23
      %p506 = scmp.lt.s32.totalorder %s23, 5
      %p507 = pnand %p505, %p506
      %p508 = pneg %p507
      // Predicated region
      $region73: #{tpu_custom_call.1} parent=5 // pred_check
        _
      $region74: #{tpu_custom_call.1} parent=5 // pred_check_branch
        %510 = sbr.rel (%p507) target = $region76
      $region75: #{tpu_custom_call.1} parent=5 // pred_region
        %s511 = ssub.s32 %s23, 1
        %s512 = smul.u32 2, %s32
        %p513 = scmp.lt.s32.totalorder %s512, 3
        %s514 = scalar_select %p513, %s512, 3
        %s515 = smul.addr %s514, 8
        %s516 = scalar_lea.vmem %s0, %s515
        %p517 = pneg %p61
        %p518 = pneg %p58
        %p519 = scmp.lt.s32.totalorder %s33, 1
        %s520 = scalar_select %p519, %s33, 1
        %s521 = scalar_lea.vmem %s1, %s520
        %p522 = pneg %p87
        %p523 = pneg %p84
        %p524 = scmp.lt.s32.totalorder %s33, 1
        %s525 = scalar_select %p524, %s33, 1
        %s526 = scalar_lea.vmem %s2, %s525
        %p527 = pneg %p113
        %p528 = pneg %p110
        %p529 = scmp.lt.s32.totalorder %s33, 1
        %s530 = scalar_select %p529, %s33, 1
        %s531 = smul.addr %s530, 4
        %s532 = smul.addr %s531, 4
        %s533 = scalar_lea.vmem %s3, %s532
        %p534 = pneg %p139
        %p535 = pneg %p136
        %p536 = scmp.lt.s32.totalorder %s33, 1
        %s537 = scalar_select %p536, %s33, 1
        %s538 = scalar_lea.vmem %s4, %s537
        %p539 = pneg %p165
        %p540 = pneg %p162
        %p541 = scmp.lt.s32.totalorder %s33, 1
        %s542 = scalar_select %p541, %s33, 1
        %s543 = scalar_lea.vmem %s5, %s542
        %p544 = pneg %p191
        %p545 = pneg %p188
        %p546 = scmp.lt.s32.totalorder %s33, 1
        %s547 = scalar_select %p546, %s33, 1
        %s548 = smul.addr %s547, 4
        %s549 = smul.addr %s548, 4
        %s550 = scalar_lea.vmem %s6, %s549
        %p551 = pneg %p217
        %p552 = pneg %p214
        %p553 = scmp.lt.s32.totalorder %s33, 1
        %s554 = scalar_select %p553, %s33, 1
        %s555 = scalar_lea.vmem %s7, %s554
        %p556 = pneg %p243
        %p557 = pneg %p240
        %p558 = scmp.lt.s32.totalorder %s33, 1
        %s559 = scalar_select %p558, %s33, 1
        %s560 = smul.addr %s559, 16
        %s561 = smul.addr %s560, 4
        %s562 = scalar_lea.vmem %s8, %s561
        %p563 = pneg %p269
        %p564 = pneg %p266
        %p565 = scmp.lt.s32.totalorder %s33, 1
        %s566 = scalar_select %p565, %s33, 1
        %s567 = scalar_lea.vmem %s9, %s566
        %p568 = pneg %p295
        %p569 = pneg %p292
        %p570 = pneg %p316
        %p571 = pneg %p313
        %p572 = pneg %p337
        %p573 = pneg %p334
        %p574 = pneg %p358
        %p575 = pneg %p355
        %p576 = pneg %p379
        %p577 = pneg %p376
        %p578 = pneg %p405
        %p579 = pneg %p402
        %s580 = sand.u32 %s392, 1
        %s581 = scalar_lea.sflag [#allocation4], %s580
        %s582 = sand.u32 %s392, 1
        %s583 = smul.addr %s582, 16
        %s584 = scalar_lea.vmem [#allocation3], %s583
        %s585 = smul.u32 2, %s32
        %p586 = scmp.lt.s32.totalorder %s585, 3
        %s587 = scalar_select %p586, %s585, 3
        %s588 = smul.addr %s587, 8
        %s589 = scalar_lea.vmem %s0, %s588
        %s590 = smul.u32 2, %s32
        %p591 = scmp.lt.s32.totalorder %s33, 1
        %s592 = scalar_select %p591, %s33, 1
        %s593 = scalar_lea.vmem %s1, %s592
        %p594 = scmp.lt.s32.totalorder %s33, 1
        %s595 = scalar_select %p594, %s33, 1
        %s596 = scalar_lea.vmem %s2, %s595
        %p597 = scmp.lt.s32.totalorder %s33, 1
        %s598 = scalar_select %p597, %s33, 1
        %s599 = smul.addr %s598, 4
        %s600 = smul.addr %s599, 4
        %s601 = scalar_lea.vmem %s3, %s600
        %p602 = scmp.lt.s32.totalorder %s33, 1
        %s603 = scalar_select %p602, %s33, 1
        %s604 = scalar_lea.vmem %s4, %s603
        %p605 = scmp.lt.s32.totalorder %s33, 1
        %s606 = scalar_select %p605, %s33, 1
        %s607 = scalar_lea.vmem %s5, %s606
        %p608 = scmp.lt.s32.totalorder %s33, 1
        %s609 = scalar_select %p608, %s33, 1
        %s610 = smul.addr %s609, 4
        %s611 = smul.addr %s610, 4
        %s612 = scalar_lea.vmem %s6, %s611
        %p613 = scmp.lt.s32.totalorder %s33, 1
        %s614 = scalar_select %p613, %s33, 1
        %s615 = scalar_lea.vmem %s7, %s614
        %p616 = scmp.lt.s32.totalorder %s33, 1
        %s617 = scalar_select %p616, %s33, 1
        %s618 = smul.addr %s617, 16
        %s619 = smul.addr %s618, 4
        %s620 = scalar_lea.vmem %s8, %s619
        %p621 = scmp.lt.s32.totalorder %s33, 1
        %s622 = scalar_select %p621, %s33, 1
        %s623 = scalar_lea.vmem %s9, %s622
        %s624 = smul.u32 2, %s32
        %p626 = scmp.eq.s32.totalorder %s33, 0
        // Predicated region
        $region77: #{tpu_custom_call.1} parent=75 // pred_check
          %p627 = pneg %p626
        $region78: #{tpu_custom_call.1} parent=75 // pred_check_branch
          %629 = sbr.rel (%p627) target = $region80
        $region79: #{tpu_custom_call.1} parent=75 // pred_region
          %v630 = vld [vmem:[%s589] sm:$0xff]
          %v631 = vld [vmem:[%s589 + $0x8] sm:$0xff]
          %vm632 = vcmask 261120
          %633 = vst.msk [vmem:[#allocation2] sm:$0xff] %vm632, %v630
          %634 = vst.msk [vmem:[#allocation2 + $0x8] sm:$0xff] %vm632, %v631
        $region80: #{tpu_custom_call.1} parent=75 // pred_fallthru
          _
        %v635 = vld [vmem:[#allocation2] sm:$0xff]
        %v636 = vld [vmem:[#allocation2 + $0x8] sm:$0xff]
        %v637 = vlaneseq
        %v638 = vshrl.u32 %v637, 7
        %v639 = vlaneseq
        %v640 = vand.u32 %v639, 127
        %vm641 = vcmp.ge.s32.totalorder %v638, %v640
        %v642 = vld [vmem:[%s593] sm:$0x1]
        %v643 = vld [vmem:[%s596] sm:$0x1]
        %vm644 = vcmask 261120
        %v645 = vsel %vm644, %v635, 0.0
        %646 = vadd.xlane.f32.xlu0 %v645
        %v647 = vpop.xlane.xlu0 %646
        %v648 = vsel %vm644, %v636, 0.0
        %649 = vadd.xlane.f32.xlu0 %v648
        %v650 = vpop.xlane.xlu0 %649
        %v651 = vrcp.pop 32.0
        %v652 = vmul.f32 32.0, %v651
        %v653 = vsub.f32 1.0, %v652
        %v654 = vmul.f32 %v651, %v653
        %v655 = vadd.f32 %v651, %v654
        %vm656 = vweird.f32 %v651
        %v657 = vsel %vm656, %v651, %v655
        %v658 = vmul.f32 %v647, %v657
        %v659 = vmul.f32 %v650, %v657
        %v660 = vsub.f32 %v635, %v658
        %v661 = vsub.f32 %v636, %v659
        %v662 = vmul.f32 %v660, %v660
        %v663 = vmul.f32 %v661, %v661
        %v664 = vsel %vm644, %v662, 0.0
        %665 = vadd.xlane.f32.xlu0 %v664
        %v666 = vpop.xlane.xlu0 %665
        %v667 = vsel %vm644, %v663, 0.0
        %668 = vadd.xlane.f32.xlu0 %v667
        %v669 = vpop.xlane.xlu0 %668
        %v670 = vmul.f32 %v666, %v657
        %v671 = vmul.f32 %v669, %v657
        %v672 = vadd.f32 %v670, 1e-05
        %v673 = vadd.f32 %v671, 1e-05
        %v674 = vrsqrt.pop %v672
        %v675 = vmul.f32 %v674, %v672
        %v676 = vmul.f32 %v675, %v674
        %v677 = vmul.f32 0.5, %v676
        %v678 = vsub.f32 1.5, %v677
        %v679 = vmul.f32 %v674, %v678
        %vm680 = vweird.f32 %v672
        %vm681 = vweird.f32 %v674
        %vm682 = vmor %vm680, %vm681
        %v683 = vsel %vm682, %v674, %v679
        %v684 = vrsqrt.pop %v673
        %v685 = vmul.f32 %v684, %v673
        %v686 = vmul.f32 %v685, %v684
        %v687 = vmul.f32 0.5, %v686
        %v688 = vsub.f32 1.5, %v687
        %v689 = vmul.f32 %v684, %v688
        %vm690 = vweird.f32 %v673
        %vm691 = vweird.f32 %v684
        %vm692 = vmor %vm690, %vm691
        %v693 = vsel %vm692, %v684, %v689
        %v694 = vmul.f32 %v660, %v683
        %v695 = vmul.f32 %v661, %v693
        %v697 = vperm.slane %v642, 0
        %v699 = vmul.f32 %v694, %v697
        %v700 = vmul.f32 %v695, %v697
        %v702 = vperm.slane %v643, 0
        %v704 = vadd.f32 %v699, %v702
        %v705 = vadd.f32 %v700, %v702
        %v706 = vpack.c.bf16 %v705, %v704
        %v707 = vld [vmem:[%s601] sm:$0xf]
        %v708 = vld [vmem:[%s601 + $0x4] sm:$0xf]
        %v709 = vld [vmem:[%s601 + $0x8] sm:$0xf]
        %v710 = vld [vmem:[%s601 + $0xc] sm:$0xf]
        %v715 = vunpack.c.l.b16 %v707
        %v716 = vunpack.c.l.b16 %v708
        %v717 = vunpack.c.l.b16 %v709
        %v718 = vunpack.c.l.b16 %v710
        %v719 = vpack.c.b16 %v716, %v715
        %v720 = vpack.c.b16 %v718, %v717
        %v724 = vsel %vm644, %v706, 0
        %726 = vmatpush.bf16.msra.mxu0 0
        %727 = vmatpush.bf16.msra.mxu0 0
        %728 = vmatpush.bf16.msra.mxu0 0
        %729 = vmatpush.bf16.msra.mxu0 0
        %730 = vmatpush.bf16.msra.mxu0 0
        %731 = vmatpush.bf16.msra.mxu0 0
        %732 = vmatpush.bf16.msra.mxu0 %v720
        %733 = vmatpush.bf16.msra.mxu0 %v719
        %734 = vmatmul.bf16.gmra.mxu0 %v724
        %v735 = vpop.f32.mrf.mxu0
        %v736 = vadd.f32 0.0, %v735
        %v737 = vpop.f32.mrf.mxu0
        %v738 = vadd.f32 0.0, %v737
        %739 = vdwg.mxu0
        %742 = vrot.lane.b32.xlu0 %v736, 120
        %v743 = vpop.permute.xlu0 %742
        %744 = vrot.lane.b32.xlu0 %v738, 120
        %v745 = vpop.permute.xlu0 %744
        %748 = vrot.lane.b32.xlu0 %v736, 112
        %v749 = vpop.permute.xlu0 %748
        %750 = vrot.lane.b32.xlu0 %v738, 112
        %v751 = vpop.permute.xlu0 %750
        %754 = vrot.lane.b32.xlu0 %v736, 104
        %v755 = vpop.permute.xlu0 %754
        %756 = vrot.lane.b32.xlu0 %v738, 104
        %v757 = vpop.permute.xlu0 %756
        %v760 = vpack.c.bf16 %v736, %v736
        %v761 = vpack.c.bf16 %v743, %v743
        %v762 = vpack.c.bf16 %v749, %v749
        %v763 = vpack.c.bf16 %v755, %v755
        %v764 = vpack.c.bf16 %v738, %v738
        %v765 = vpack.c.bf16 %v745, %v745
        %v766 = vpack.c.bf16 %v751, %v751
        %v767 = vpack.c.bf16 %v757, %v757
        %v769 = vunpack.c.l.b16 %v760
        %v770 = vpack.c.b16 %v769, %v769
        %771 = vrot.lane.b32.xlu0 %v770, 96
        %v772 = vpop.permute.xlu0 %771
        %vm773 = vcmask 64512
        %v775 = vsel %vm773, %v760, 0
        %v778 = vsel %vm773, %v772, 0
        %780 = vmatpush.bf16.xpose.msra.mxu0 0
        %781 = vmatpush.bf16.xpose.msra.mxu0 0
        %782 = vmatpush.bf16.xpose.msra.mxu0 0
        %783 = vmatpush.bf16.xpose.msra.mxu0 0
        %784 = vmatpush.bf16.xpose.msra.mxu0 0
        %785 = vmatpush.bf16.xpose.msra.mxu0 0
        %786 = vmatpush.bf16.xpose.msra.mxu0 0
        %787 = vmatpush.bf16.xpose.msra.mxu0 %v778
        %788 = vmatmul.bf16.gmra.mxu0 %v775
        %v789 = vpop.f32.mrf.mxu0
        %v790 = vadd.f32 0.0, %v789
        %v791 = vpop.f32.mrf.mxu0
        %792 = vdwg.mxu0
        %v794 = vunpack.c.l.b16 %v761
        %v795 = vpack.c.b16 %v794, %v794
        %796 = vrot.lane.b32.xlu0 %v795, 96
        %v797 = vpop.permute.xlu0 %796
        %v799 = vsel %vm773, %v761, 0
        %v802 = vsel %vm773, %v797, 0
        %804 = vmatpush.bf16.xpose.msra.mxu0 0
        %805 = vmatpush.bf16.xpose.msra.mxu0 0
        %806 = vmatpush.bf16.xpose.msra.mxu0 0
        %807 = vmatpush.bf16.xpose.msra.mxu0 0
        %808 = vmatpush.bf16.xpose.msra.mxu0 0
        %809 = vmatpush.bf16.xpose.msra.mxu0 0
        %810 = vmatpush.bf16.xpose.msra.mxu0 0
        %811 = vmatpush.bf16.xpose.msra.mxu0 %v802
        %812 = vmatmul.bf16.gmra.mxu0 %v799
        %v813 = vpop.f32.mrf.mxu0
        %v814 = vadd.f32 0.0, %v813
        %v815 = vpop.f32.mrf.mxu0
        %816 = vdwg.mxu0
        %v818 = vunpack.c.l.b16 %v762
        %v819 = vpack.c.b16 %v818, %v818
        %820 = vrot.lane.b32.xlu0 %v819, 96
        %v821 = vpop.permute.xlu0 %820
        %v823 = vsel %vm773, %v762, 0
        %v826 = vsel %vm773, %v821, 0
        %828 = vmatpush.bf16.xpose.msra.mxu0 0
        %829 = vmatpush.bf16.xpose.msra.mxu0 0
        %830 = vmatpush.bf16.xpose.msra.mxu0 0
        %831 = vmatpush.bf16.xpose.msra.mxu0 0
        %832 = vmatpush.bf16.xpose.msra.mxu0 0
        %833 = vmatpush.bf16.xpose.msra.mxu0 0
        %834 = vmatpush.bf16.xpose.msra.mxu0 0
        %835 = vmatpush.bf16.xpose.msra.mxu0 %v826
        %836 = vmatmul.bf16.gmra.mxu0 %v823
        %v837 = vpop.f32.mrf.mxu0
        %v838 = vadd.f32 0.0, %v837
        %v839 = vpop.f32.mrf.mxu0
        %840 = vdwg.mxu0
        %v842 = vunpack.c.l.b16 %v763
        %v843 = vpack.c.b16 %v842, %v842
        %844 = vrot.lane.b32.xlu0 %v843, 96
        %v845 = vpop.permute.xlu0 %844
        %v847 = vsel %vm773, %v763, 0
        %v850 = vsel %vm773, %v845, 0
        %852 = vmatpush.bf16.xpose.msra.mxu0 0
        %853 = vmatpush.bf16.xpose.msra.mxu0 0
        %854 = vmatpush.bf16.xpose.msra.mxu0 0
        %855 = vmatpush.bf16.xpose.msra.mxu0 0
        %856 = vmatpush.bf16.xpose.msra.mxu0 0
        %857 = vmatpush.bf16.xpose.msra.mxu0 0
        %858 = vmatpush.bf16.xpose.msra.mxu0 0
        %859 = vmatpush.bf16.xpose.msra.mxu0 %v850
        %860 = vmatmul.bf16.gmra.mxu0 %v847
        %v861 = vpop.f32.mrf.mxu0
        %v862 = vadd.f32 0.0, %v861
        %v863 = vpop.f32.mrf.mxu0
        %864 = vdwg.mxu0
        %v866 = vunpack.c.l.b16 %v764
        %v867 = vpack.c.b16 %v866, %v866
        %868 = vrot.lane.b32.xlu0 %v867, 96
        %v869 = vpop.permute.xlu0 %868
        %v871 = vsel %vm773, %v764, 0
        %v874 = vsel %vm773, %v869, 0
        %876 = vmatpush.bf16.xpose.msra.mxu0 0
        %877 = vmatpush.bf16.xpose.msra.mxu0 0
        %878 = vmatpush.bf16.xpose.msra.mxu0 0
        %879 = vmatpush.bf16.xpose.msra.mxu0 0
        %880 = vmatpush.bf16.xpose.msra.mxu0 0
        %881 = vmatpush.bf16.xpose.msra.mxu0 0
        %882 = vmatpush.bf16.xpose.msra.mxu0 0
        %883 = vmatpush.bf16.xpose.msra.mxu0 %v874
        %884 = vmatmul.bf16.gmra.mxu0 %v871
        %v885 = vpop.f32.mrf.mxu0
        %v886 = vadd.f32 0.0, %v885
        %v887 = vpop.f32.mrf.mxu0
        %888 = vdwg.mxu0
        %v890 = vunpack.c.l.b16 %v765
        %v891 = vpack.c.b16 %v890, %v890
        %892 = vrot.lane.b32.xlu0 %v891, 96
        %v893 = vpop.permute.xlu0 %892
        %v895 = vsel %vm773, %v765, 0
        %v898 = vsel %vm773, %v893, 0
        %900 = vmatpush.bf16.xpose.msra.mxu0 0
        %901 = vmatpush.bf16.xpose.msra.mxu0 0
        %902 = vmatpush.bf16.xpose.msra.mxu0 0
        %903 = vmatpush.bf16.xpose.msra.mxu0 0
        %904 = vmatpush.bf16.xpose.msra.mxu0 0
        %905 = vmatpush.bf16.xpose.msra.mxu0 0
        %906 = vmatpush.bf16.xpose.msra.mxu0 0
        %907 = vmatpush.bf16.xpose.msra.mxu0 %v898
        %908 = vmatmul.bf16.gmra.mxu0 %v895
        %v909 = vpop.f32.mrf.mxu0
        %v910 = vadd.f32 0.0, %v909
        %v911 = vpop.f32.mrf.mxu0
        %912 = vdwg.mxu0
        %v914 = vunpack.c.l.b16 %v766
        %v915 = vpack.c.b16 %v914, %v914
        %916 = vrot.lane.b32.xlu0 %v915, 96
        %v917 = vpop.permute.xlu0 %916
        %v919 = vsel %vm773, %v766, 0
        %v922 = vsel %vm773, %v917, 0
        %924 = vmatpush.bf16.xpose.msra.mxu0 0
        %925 = vmatpush.bf16.xpose.msra.mxu0 0
        %926 = vmatpush.bf16.xpose.msra.mxu0 0
        %927 = vmatpush.bf16.xpose.msra.mxu0 0
        %928 = vmatpush.bf16.xpose.msra.mxu0 0
        %929 = vmatpush.bf16.xpose.msra.mxu0 0
        %930 = vmatpush.bf16.xpose.msra.mxu0 0
        %931 = vmatpush.bf16.xpose.msra.mxu0 %v922
        %932 = vmatmul.bf16.gmra.mxu0 %v919
        %v933 = vpop.f32.mrf.mxu0
        %v934 = vadd.f32 0.0, %v933
        %v935 = vpop.f32.mrf.mxu0
        %936 = vdwg.mxu0
        %v938 = vunpack.c.l.b16 %v767
        %v939 = vpack.c.b16 %v938, %v938
        %940 = vrot.lane.b32.xlu0 %v939, 96
        %v941 = vpop.permute.xlu0 %940
        %v943 = vsel %vm773, %v767, 0
        %v946 = vsel %vm773, %v941, 0
        %948 = vmatpush.bf16.xpose.msra.mxu0 0
        %949 = vmatpush.bf16.xpose.msra.mxu0 0
        %950 = vmatpush.bf16.xpose.msra.mxu0 0
        %951 = vmatpush.bf16.xpose.msra.mxu0 0
        %952 = vmatpush.bf16.xpose.msra.mxu0 0
        %953 = vmatpush.bf16.xpose.msra.mxu0 0
        %954 = vmatpush.bf16.xpose.msra.mxu0 0
        %955 = vmatpush.bf16.xpose.msra.mxu0 %v946
        %956 = vmatmul.bf16.gmra.mxu0 %v943
        %v957 = vpop.f32.mrf.mxu0
        %v958 = vadd.f32 0.0, %v957
        %v959 = vpop.f32.mrf.mxu0
        %960 = vdwg.mxu0
        %v961 = vmul.f32 %v790, 0.35355338
        %v962 = vmul.f32 %v814, 0.35355338
        %v963 = vmul.f32 %v838, 0.35355338
        %v964 = vmul.f32 %v862, 0.35355338
        %v965 = vmul.f32 %v886, 0.35355338
        %v966 = vmul.f32 %v910, 0.35355338
        %v967 = vmul.f32 %v934, 0.35355338
        %v968 = vmul.f32 %v958, 0.35355338
        %v969 = vsel %vm641, 1, 0
        %vm970 = vcmp.eq.s32.totalorder %v969, 1
        %v971 = vsel %vm970, %v961, -1e+30
        %v972 = vsel %vm970, %v962, -1e+30
        %v973 = vsel %vm970, %v963, -1e+30
        %v974 = vsel %vm970, %v964, -1e+30
        %v975 = vsel %vm970, %v965, -1e+30
        %v976 = vsel %vm970, %v966, -1e+30
        %v977 = vsel %vm970, %v967, -1e+30
        %v978 = vsel %vm970, %v968, -1e+30
        %v979 = vsel %vm773, %v971, -inf
        %980 = vmax.xlane.f32.xlu0 %v979
        %v981 = vpop.xlane.xlu0 %980
        %v982 = vsel %vm773, %v972, -inf
        %983 = vmax.xlane.f32.xlu0 %v982
        %v984 = vpop.xlane.xlu0 %983
        %v985 = vsel %vm773, %v973, -inf
        %986 = vmax.xlane.f32.xlu0 %v985
        %v987 = vpop.xlane.xlu0 %986
        %v988 = vsel %vm773, %v974, -inf
        %989 = vmax.xlane.f32.xlu0 %v988
        %v990 = vpop.xlane.xlu0 %989
        %v991 = vsel %vm773, %v975, -inf
        %992 = vmax.xlane.f32.xlu0 %v991
        %v993 = vpop.xlane.xlu0 %992
        %v994 = vsel %vm773, %v976, -inf
        %995 = vmax.xlane.f32.xlu0 %v994
        %v996 = vpop.xlane.xlu0 %995
        %v997 = vsel %vm773, %v977, -inf
        %998 = vmax.xlane.f32.xlu0 %v997
        %v999 = vpop.xlane.xlu0 %998
        %v1000 = vsel %vm773, %v978, -inf
        %1001 = vmax.xlane.f32.xlu0 %v1000
        %v1002 = vpop.xlane.xlu0 %1001
        %v1003 = vsub.f32 %v971, %v981
        %v1004 = vsub.f32 %v972, %v984
        %v1005 = vsub.f32 %v973, %v987
        %v1006 = vsub.f32 %v974, %v990
        %v1007 = vsub.f32 %v975, %v993
        %v1008 = vsub.f32 %v976, %v996
        %v1009 = vsub.f32 %v977, %v999
        %v1010 = vsub.f32 %v978, %v1002
        %v1011 = vmul.f32 %v1003, 1.442695
        %v1012 = vpow.pop %v1011
        %v1013 = vmul.f32 %v1004, 1.442695
        %v1014 = vpow.pop %v1013
        %v1015 = vmul.f32 %v1005, 1.442695
        %v1016 = vpow.pop %v1015
        %v1017 = vmul.f32 %v1006, 1.442695
        %v1018 = vpow.pop %v1017
        %v1019 = vmul.f32 %v1007, 1.442695
        %v1020 = vpow.pop %v1019
        %v1021 = vmul.f32 %v1008, 1.442695
        %v1022 = vpow.pop %v1021
        %v1023 = vmul.f32 %v1009, 1.442695
        %v1024 = vpow.pop %v1023
        %v1025 = vmul.f32 %v1010, 1.442695
        %v1026 = vpow.pop %v1025
        %v1027 = vsel %vm773, %v1012, 0.0
        %1028 = vadd.xlane.f32.xlu0 %v1027
        %v1029 = vpop.xlane.xlu0 %1028
        %v1030 = vsel %vm773, %v1014, 0.0
        %1031 = vadd.xlane.f32.xlu0 %v1030
        %v1032 = vpop.xlane.xlu0 %1031
        %v1033 = vsel %vm773, %v1016, 0.0
        %1034 = vadd.xlane.f32.xlu0 %v1033
        %v1035 = vpop.xlane.xlu0 %1034
        %v1036 = vsel %vm773, %v1018, 0.0
        %1037 = vadd.xlane.f32.xlu0 %v1036
        %v1038 = vpop.xlane.xlu0 %1037
        %v1039 = vsel %vm773, %v1020, 0.0
        %1040 = vadd.xlane.f32.xlu0 %v1039
        %v1041 = vpop.xlane.xlu0 %1040
        %v1042 = vsel %vm773, %v1022, 0.0
        %1043 = vadd.xlane.f32.xlu0 %v1042
        %v1044 = vpop.xlane.xlu0 %1043
        %v1045 = vsel %vm773, %v1024, 0.0
        %1046 = vadd.xlane.f32.xlu0 %v1045
        %v1047 = vpop.xlane.xlu0 %1046
        %v1048 = vsel %vm773, %v1026, 0.0
        %1049 = vadd.xlane.f32.xlu0 %v1048
        %v1050 = vpop.xlane.xlu0 %1049
        %v1051 = vrcp.pop %v1029
        %v1052 = vrcp.pop %v1032
        %v1053 = vrcp.pop %v1035
        %v1054 = vrcp.pop %v1038
        %v1055 = vrcp.pop %v1041
        %v1056 = vrcp.pop %v1044
        %v1057 = vrcp.pop %v1047
        %v1058 = vrcp.pop %v1050
        %v1059 = vmul.f32 %v1012, %v1051
        %v1060 = vmul.f32 %v1014, %v1052
        %v1061 = vmul.f32 %v1016, %v1053
        %v1062 = vmul.f32 %v1018, %v1054
        %v1063 = vmul.f32 %v1020, %v1055
        %v1064 = vmul.f32 %v1022, %v1056
        %v1065 = vmul.f32 %v1024, %v1057
        %v1066 = vmul.f32 %v1026, %v1058
        %v1067 = vpack.c.bf16 %v1059, %v1059
        %v1068 = vpack.c.bf16 %v1060, %v1060
        %v1069 = vpack.c.bf16 %v1061, %v1061
        %v1070 = vpack.c.bf16 %v1062, %v1062
        %v1071 = vpack.c.bf16 %v1063, %v1063
        %v1072 = vpack.c.bf16 %v1064, %v1064
        %v1073 = vpack.c.bf16 %v1065, %v1065
        %v1074 = vpack.c.bf16 %v1066, %v1066
        %1075 = vrot.lane.b32.xlu0 %v770, 64
        %v1076 = vpop.permute.xlu0 %1075
        %v1078 = vsel %vm773, %v1067, 0
        %vm1080 = vcmask 1043456
        %v1082 = vsel %vm1080, %v1076, 0
        %1084 = vmatpush.bf16.msra.mxu0 0
        %1085 = vmatpush.bf16.msra.mxu0 0
        %1086 = vmatpush.bf16.msra.mxu0 0
        %1087 = vmatpush.bf16.msra.mxu0 0
        %1088 = vmatpush.bf16.msra.mxu0 0
        %1089 = vmatpush.bf16.msra.mxu0 0
        %1090 = vmatpush.bf16.msra.mxu0 0
        %1091 = vmatpush.bf16.msra.mxu0 %v1082
        %1092 = vmatmul.bf16.gmra.mxu0 %v1078
        %v1093 = vpop.f32.mrf.mxu0
        %v1094 = vadd.f32 0.0, %v1093
        %v1095 = vpop.f32.mrf.mxu0
        %1096 = vdwg.mxu0
        %1097 = vrot.lane.b32.xlu0 %v795, 64
        %v1098 = vpop.permute.xlu0 %1097
        %v1100 = vsel %vm773, %v1068, 0
        %v1103 = vsel %vm1080, %v1098, 0
        %1105 = vmatpush.bf16.msra.mxu0 0
        %1106 = vmatpush.bf16.msra.mxu0 0
        %1107 = vmatpush.bf16.msra.mxu0 0
        %1108 = vmatpush.bf16.msra.mxu0 0
        %1109 = vmatpush.bf16.msra.mxu0 0
        %1110 = vmatpush.bf16.msra.mxu0 0
        %1111 = vmatpush.bf16.msra.mxu0 0
        %1112 = vmatpush.bf16.msra.mxu0 %v1103
        %1113 = vmatmul.bf16.gmra.mxu0 %v1100
        %v1114 = vpop.f32.mrf.mxu0
        %v1115 = vadd.f32 0.0, %v1114
        %v1116 = vpop.f32.mrf.mxu0
        %1117 = vdwg.mxu0
        %1118 = vrot.lane.b32.xlu0 %v819, 64
        %v1119 = vpop.permute.xlu0 %1118
        %v1121 = vsel %vm773, %v1069, 0
        %v1124 = vsel %vm1080, %v1119, 0
        %1126 = vmatpush.bf16.msra.mxu0 0
        %1127 = vmatpush.bf16.msra.mxu0 0
        %1128 = vmatpush.bf16.msra.mxu0 0
        %1129 = vmatpush.bf16.msra.mxu0 0
        %1130 = vmatpush.bf16.msra.mxu0 0
        %1131 = vmatpush.bf16.msra.mxu0 0
        %1132 = vmatpush.bf16.msra.mxu0 0
        %1133 = vmatpush.bf16.msra.mxu0 %v1124
        %1134 = vmatmul.bf16.gmra.mxu0 %v1121
        %v1135 = vpop.f32.mrf.mxu0
        %v1136 = vadd.f32 0.0, %v1135
        %v1137 = vpop.f32.mrf.mxu0
        %1138 = vdwg.mxu0
        %1139 = vrot.lane.b32.xlu0 %v843, 64
        %v1140 = vpop.permute.xlu0 %1139
        %v1142 = vsel %vm773, %v1070, 0
        %v1145 = vsel %vm1080, %v1140, 0
        %1147 = vmatpush.bf16.msra.mxu0 0
        %1148 = vmatpush.bf16.msra.mxu0 0
        %1149 = vmatpush.bf16.msra.mxu0 0
        %1150 = vmatpush.bf16.msra.mxu0 0
        %1151 = vmatpush.bf16.msra.mxu0 0
        %1152 = vmatpush.bf16.msra.mxu0 0
        %1153 = vmatpush.bf16.msra.mxu0 0
        %1154 = vmatpush.bf16.msra.mxu0 %v1145
        %1155 = vmatmul.bf16.gmra.mxu0 %v1142
        %v1156 = vpop.f32.mrf.mxu0
        %v1157 = vadd.f32 0.0, %v1156
        %v1158 = vpop.f32.mrf.mxu0
        %1159 = vdwg.mxu0
        %1160 = vrot.lane.b32.xlu0 %v867, 64
        %v1161 = vpop.permute.xlu0 %1160
        %v1163 = vsel %vm773, %v1071, 0
        %v1166 = vsel %vm1080, %v1161, 0
        %1168 = vmatpush.bf16.msra.mxu0 0
        %1169 = vmatpush.bf16.msra.mxu0 0
        %1170 = vmatpush.bf16.msra.mxu0 0
        %1171 = vmatpush.bf16.msra.mxu0 0
        %1172 = vmatpush.bf16.msra.mxu0 0
        %1173 = vmatpush.bf16.msra.mxu0 0
        %1174 = vmatpush.bf16.msra.mxu0 0
        %1175 = vmatpush.bf16.msra.mxu0 %v1166
        %1176 = vmatmul.bf16.gmra.mxu0 %v1163
        %v1177 = vpop.f32.mrf.mxu0
        %v1178 = vadd.f32 0.0, %v1177
        %v1179 = vpop.f32.mrf.mxu0
        %1180 = vdwg.mxu0
        %1181 = vrot.lane.b32.xlu0 %v891, 64
        %v1182 = vpop.permute.xlu0 %1181
        %v1184 = vsel %vm773, %v1072, 0
        %v1187 = vsel %vm1080, %v1182, 0
        %1189 = vmatpush.bf16.msra.mxu0 0
        %1190 = vmatpush.bf16.msra.mxu0 0
        %1191 = vmatpush.bf16.msra.mxu0 0
        %1192 = vmatpush.bf16.msra.mxu0 0
        %1193 = vmatpush.bf16.msra.mxu0 0
        %1194 = vmatpush.bf16.msra.mxu0 0
        %1195 = vmatpush.bf16.msra.mxu0 0
        %1196 = vmatpush.bf16.msra.mxu0 %v1187
        %1197 = vmatmul.bf16.gmra.mxu0 %v1184
        %v1198 = vpop.f32.mrf.mxu0
        %v1199 = vadd.f32 0.0, %v1198
        %v1200 = vpop.f32.mrf.mxu0
        %1201 = vdwg.mxu0
        %1202 = vrot.lane.b32.xlu0 %v915, 64
        %v1203 = vpop.permute.xlu0 %1202
        %v1205 = vsel %vm773, %v1073, 0
        %v1208 = vsel %vm1080, %v1203, 0
        %1210 = vmatpush.bf16.msra.mxu0 0
        %1211 = vmatpush.bf16.msra.mxu0 0
        %1212 = vmatpush.bf16.msra.mxu0 0
        %1213 = vmatpush.bf16.msra.mxu0 0
        %1214 = vmatpush.bf16.msra.mxu0 0
        %1215 = vmatpush.bf16.msra.mxu0 0
        %1216 = vmatpush.bf16.msra.mxu0 0
        %1217 = vmatpush.bf16.msra.mxu0 %v1208
        %1218 = vmatmul.bf16.gmra.mxu0 %v1205
        %v1219 = vpop.f32.mrf.mxu0
        %v1220 = vadd.f32 0.0, %v1219
        %v1221 = vpop.f32.mrf.mxu0
        %1222 = vdwg.mxu0
        %1223 = vrot.lane.b32.xlu0 %v939, 64
        %v1224 = vpop.permute.xlu0 %1223
        %v1226 = vsel %vm773, %v1074, 0
        %v1229 = vsel %vm1080, %v1224, 0
        %1231 = vmatpush.bf16.msra.mxu0 0
        %1232 = vmatpush.bf16.msra.mxu0 0
        %1233 = vmatpush.bf16.msra.mxu0 0
        %1234 = vmatpush.bf16.msra.mxu0 0
        %1235 = vmatpush.bf16.msra.mxu0 0
        %1236 = vmatpush.bf16.msra.mxu0 0
        %1237 = vmatpush.bf16.msra.mxu0 0
        %1238 = vmatpush.bf16.msra.mxu0 %v1229
        %1239 = vmatmul.bf16.gmra.mxu0 %v1226
        %v1240 = vpop.f32.mrf.mxu0
        %v1241 = vadd.f32 0.0, %v1240
        %v1242 = vpop.f32.mrf.mxu0
        %1243 = vdwg.mxu0
        %1246 = vrot.lane.b32.xlu0 %v1115, 8
        %v1247 = vpop.permute.xlu0 %1246
        %1248 = vrot.lane.b32.xlu0 %v1199, 8
        %v1249 = vpop.permute.xlu0 %1248
        %1254 = vrot.lane.b32.xlu0 %v1136, 16
        %v1255 = vpop.permute.xlu0 %1254
        %1256 = vrot.lane.b32.xlu0 %v1220, 16
        %v1257 = vpop.permute.xlu0 %1256
        %1262 = vrot.lane.b32.xlu0 %v1157, 24
        %v1263 = vpop.permute.xlu0 %1262
        %1264 = vrot.lane.b32.xlu0 %v1241, 24
        %v1265 = vpop.permute.xlu0 %1264
        %v1268 = vsel %vm773, %v1094, %v1247
        %v1269 = vsel %vm773, %v1178, %v1249
        %vm1270 = vcmask 130048
        %v1271 = vsel %vm1270, %v1268, %v1255
        %v1272 = vsel %vm1270, %v1269, %v1257
        %vm1273 = vcmask 195584
        %v1274 = vsel %vm1273, %v1271, %v1263
        %v1275 = vsel %vm1273, %v1272, %v1265
        %v1276 = vadd.f32 %v635, %v1274
        %v1277 = vadd.f32 %v636, %v1275
        %v1278 = vld [vmem:[%s604] sm:$0x1]
        %v1279 = vld [vmem:[%s607] sm:$0x1]
        %v1280 = vsel %vm644, %v1276, 0.0
        %1281 = vadd.xlane.f32.xlu0 %v1280
        %v1282 = vpop.xlane.xlu0 %1281
        %v1283 = vsel %vm644, %v1277, 0.0
        %1284 = vadd.xlane.f32.xlu0 %v1283
        %v1285 = vpop.xlane.xlu0 %1284
        %v1286 = vmul.f32 %v1282, %v657
        %v1287 = vmul.f32 %v1285, %v657
        %v1288 = vsub.f32 %v1276, %v1286
        %v1289 = vsub.f32 %v1277, %v1287
        %v1290 = vmul.f32 %v1288, %v1288
        %v1291 = vmul.f32 %v1289, %v1289
        %v1292 = vsel %vm644, %v1290, 0.0
        %1293 = vadd.xlane.f32.xlu0 %v1292
        %v1294 = vpop.xlane.xlu0 %1293
        %v1295 = vsel %vm644, %v1291, 0.0
        %1296 = vadd.xlane.f32.xlu0 %v1295
        %v1297 = vpop.xlane.xlu0 %1296
        %v1298 = vmul.f32 %v1294, %v657
        %v1299 = vmul.f32 %v1297, %v657
        %v1300 = vadd.f32 %v1298, 1e-05
        %v1301 = vadd.f32 %v1299, 1e-05
        %v1302 = vrsqrt.pop %v1300
        %v1303 = vmul.f32 %v1302, %v1300
        %v1304 = vmul.f32 %v1303, %v1302
        %v1305 = vmul.f32 0.5, %v1304
        %v1306 = vsub.f32 1.5, %v1305
        %v1307 = vmul.f32 %v1302, %v1306
        %vm1308 = vweird.f32 %v1300
        %vm1309 = vweird.f32 %v1302
        %vm1310 = vmor %vm1308, %vm1309
        %v1311 = vsel %vm1310, %v1302, %v1307
        %v1312 = vrsqrt.pop %v1301
        %v1313 = vmul.f32 %v1312, %v1301
        %v1314 = vmul.f32 %v1313, %v1312
        %v1315 = vmul.f32 0.5, %v1314
        %v1316 = vsub.f32 1.5, %v1315
        %v1317 = vmul.f32 %v1312, %v1316
        %vm1318 = vweird.f32 %v1301
        %vm1319 = vweird.f32 %v1312
        %vm1320 = vmor %vm1318, %vm1319
        %v1321 = vsel %vm1320, %v1312, %v1317
        %v1322 = vmul.f32 %v1288, %v1311
        %v1323 = vmul.f32 %v1289, %v1321
        %v1325 = vperm.slane %v1278, 0
        %v1327 = vmul.f32 %v1322, %v1325
        %v1328 = vmul.f32 %v1323, %v1325
        %v1330 = vperm.slane %v1279, 0
        %v1332 = vadd.f32 %v1327, %v1330
        %v1333 = vadd.f32 %v1328, %v1330
        %v1334 = vpack.c.bf16 %v1333, %v1332
        %v1335 = vld [vmem:[%s612] sm:$0xf]
        %v1336 = vld [vmem:[%s612 + $0x4] sm:$0xf]
        %v1337 = vld [vmem:[%s612 + $0x8] sm:$0xf]
        %v1338 = vld [vmem:[%s612 + $0xc] sm:$0xf]
        %v1339 = vld [vmem:[%s615] sm:$0x1]
        %v1341 = vperm.slane %v1339, 0
        %v1347 = vunpack.c.l.b16 %v1335
        %v1348 = vunpack.c.l.b16 %v1336
        %v1349 = vunpack.c.l.b16 %v1337
        %v1350 = vunpack.c.l.b16 %v1338
        %v1351 = vpack.c.b16 %v1348, %v1347
        %v1352 = vpack.c.b16 %v1350, %v1349
        %v1356 = vsel %vm644, %v1334, 0
        %1358 = vmatpush.bf16.msra.mxu0 0
        %1359 = vmatpush.bf16.msra.mxu0 0
        %1360 = vmatpush.bf16.msra.mxu0 0
        %1361 = vmatpush.bf16.msra.mxu0 0
        %1362 = vmatpush.bf16.msra.mxu0 0
        %1363 = vmatpush.bf16.msra.mxu0 0
        %1364 = vmatpush.bf16.msra.mxu0 %v1352
        %1365 = vmatpush.bf16.msra.mxu0 %v1351
        %1366 = vmatmul.bf16.gmra.mxu0 %v1356
        %v1367 = vpop.f32.mrf.mxu0
        %v1368 = vadd.f32 %v1341, %v1367
        %v1369 = vpop.f32.mrf.mxu0
        %v1370 = vadd.f32 %v1341, %v1369
        %1371 = vdwg.mxu0
        %v1372 = vmax.f32 %v1368, 0.0
        %v1373 = vmax.f32 %v1370, 0.0
        %v1374 = vpack.c.bf16 %v1373, %v1372
        %v1375 = vld [vmem:[%s620] sm:$0xf]
        %v1376 = vld [vmem:[%s620 + $0x4] sm:$0xf]
        %v1377 = vld [vmem:[%s620 + $0x8] sm:$0xf]
        %v1378 = vld [vmem:[%s620 + $0xc] sm:$0xf]
        %v1379 = vld [vmem:[%s620 + $0x10] sm:$0xf]
        %v1380 = vld [vmem:[%s620 + $0x14] sm:$0xf]
        %v1381 = vld [vmem:[%s620 + $0x18] sm:$0xf]
        %v1382 = vld [vmem:[%s620 + $0x1c] sm:$0xf]
        %v1383 = vld [vmem:[%s620 + $0x20] sm:$0xf]
        %v1384 = vld [vmem:[%s620 + $0x24] sm:$0xf]
        %v1385 = vld [vmem:[%s620 + $0x28] sm:$0xf]
        %v1386 = vld [vmem:[%s620 + $0x2c] sm:$0xf]
        %v1387 = vld [vmem:[%s620 + $0x30] sm:$0xf]
        %v1388 = vld [vmem:[%s620 + $0x34] sm:$0xf]
        %v1389 = vld [vmem:[%s620 + $0x38] sm:$0xf]
        %v1390 = vld [vmem:[%s620 + $0x3c] sm:$0xf]
        %v1391 = vld [vmem:[%s623] sm:$0x1]
        %v1393 = vperm.slane %v1391, 0
        %v1411 = vunpack.c.l.b16 %v1375
        %v1412 = vunpack.c.l.b16 %v1376
        %v1413 = vunpack.c.l.b16 %v1377
        %v1414 = vunpack.c.l.b16 %v1378
        %v1415 = vunpack.c.l.b16 %v1379
        %v1416 = vunpack.c.l.b16 %v1380
        %v1417 = vunpack.c.l.b16 %v1381
        %v1418 = vunpack.c.l.b16 %v1382
        %v1419 = vunpack.c.l.b16 %v1383
        %v1420 = vunpack.c.l.b16 %v1384
        %v1421 = vunpack.c.l.b16 %v1385
        %v1422 = vunpack.c.l.b16 %v1386
        %v1423 = vunpack.c.l.b16 %v1387
        %v1424 = vunpack.c.l.b16 %v1388
        %v1425 = vunpack.c.l.b16 %v1389
        %v1426 = vunpack.c.l.b16 %v1390
        %v1427 = vpack.c.b16 %v1412, %v1411
        %v1428 = vpack.c.b16 %v1414, %v1413
        %v1429 = vpack.c.b16 %v1416, %v1415
        %v1430 = vpack.c.b16 %v1418, %v1417
        %v1431 = vpack.c.b16 %v1420, %v1419
        %v1432 = vpack.c.b16 %v1422, %v1421
        %v1433 = vpack.c.b16 %v1424, %v1423
        %v1434 = vpack.c.b16 %v1426, %v1425
        %1443 = vmatpush.bf16.msra.mxu0 %v1434
        %1444 = vmatpush.bf16.msra.mxu0 %v1433
        %1445 = vmatpush.bf16.msra.mxu0 %v1432
        %1446 = vmatpush.bf16.msra.mxu0 %v1431
        %1447 = vmatpush.bf16.msra.mxu0 %v1430
        %1448 = vmatpush.bf16.msra.mxu0 %v1429
        %1449 = vmatpush.bf16.msra.mxu0 %v1428
        %1450 = vmatpush.bf16.msra.mxu0 %v1427
        %1451 = vmatmul.bf16.gmra.mxu0 %v1374
        %v1452 = vpop.f32.mrf.mxu0
        %v1453 = vadd.f32 %v1393, %v1452
        %v1454 = vpop.f32.mrf.mxu0
        %v1455 = vadd.f32 %v1393, %v1454
        %1456 = vdwg.mxu0
        %v1457 = vadd.f32 %v1276, %v1453
        %v1458 = vadd.f32 %v1277, %v1455
        %1459 = vst.msk [vmem:[#allocation2] sm:$0xff] %vm644, %v1457
        %1460 = vst.msk [vmem:[#allocation2 + $0x8] sm:$0xff] %vm644, %v1458
        %p1461 = scmp.eq.s32.totalorder %s33, 1
        // Predicated region
        $region81: #{tpu_custom_call.1} parent=75 // pred_check
          %p1462 = pneg %p1461
        $region82: #{tpu_custom_call.1} parent=75 // pred_check_branch
          %1464 = sbr.rel (%p1462) target = $region84
        $region83: #{tpu_custom_call.1} parent=75 // pred_region
          %v1465 = vld [vmem:[%s10] sm:$0x1]
          %v1466 = vld [vmem:[%s11] sm:$0x1]
          %v1467 = vsel %vm644, %v1457, 0.0
          %1468 = vadd.xlane.f32.xlu0 %v1467
          %v1469 = vpop.xlane.xlu0 %1468
          %v1470 = vsel %vm644, %v1458, 0.0
          %1471 = vadd.xlane.f32.xlu0 %v1470
          %v1472 = vpop.xlane.xlu0 %1471
          %v1473 = vmul.f32 %v1469, %v657
          %v1474 = vmul.f32 %v1472, %v657
          %v1475 = vsub.f32 %v1457, %v1473
          %v1476 = vsub.f32 %v1458, %v1474
          %v1477 = vmul.f32 %v1475, %v1475
          %v1478 = vmul.f32 %v1476, %v1476
          %v1479 = vsel %vm644, %v1477, 0.0
          %1480 = vadd.xlane.f32.xlu0 %v1479
          %v1481 = vpop.xlane.xlu0 %1480
          %v1482 = vsel %vm644, %v1478, 0.0
          %1483 = vadd.xlane.f32.xlu0 %v1482
          %v1484 = vpop.xlane.xlu0 %1483
          %v1485 = vmul.f32 %v1481, %v657
          %v1486 = vmul.f32 %v1484, %v657
          %v1487 = vadd.f32 %v1485, 1e-05
          %v1488 = vadd.f32 %v1486, 1e-05
          %v1489 = vrsqrt.pop %v1487
          %v1490 = vmul.f32 %v1489, %v1487
          %v1491 = vmul.f32 %v1490, %v1489
          %v1492 = vmul.f32 0.5, %v1491
          %v1493 = vsub.f32 1.5, %v1492
          %v1494 = vmul.f32 %v1489, %v1493
          %vm1495 = vweird.f32 %v1487
          %vm1496 = vweird.f32 %v1489
          %vm1497 = vmor %vm1495, %vm1496
          %v1498 = vsel %vm1497, %v1489, %v1494
          %v1499 = vrsqrt.pop %v1488
          %v1500 = vmul.f32 %v1499, %v1488
          %v1501 = vmul.f32 %v1500, %v1499
          %v1502 = vmul.f32 0.5, %v1501
          %v1503 = vsub.f32 1.5, %v1502
          %v1504 = vmul.f32 %v1499, %v1503
          %vm1505 = vweird.f32 %v1488
          %vm1506 = vweird.f32 %v1499
          %vm1507 = vmor %vm1505, %vm1506
          %v1508 = vsel %vm1507, %v1499, %v1504
          %v1509 = vmul.f32 %v1475, %v1498
          %v1510 = vmul.f32 %v1476, %v1508
          %v1512 = vperm.slane %v1465, 0
          %v1514 = vmul.f32 %v1509, %v1512
          %v1515 = vmul.f32 %v1510, %v1512
          %v1517 = vperm.slane %v1466, 0
          %v1519 = vadd.f32 %v1514, %v1517
          %v1520 = vadd.f32 %v1515, %v1517
          %v1521 = vpack.c.bf16 %v1520, %v1519
          %v1522 = vld [vmem:[%s12] sm:$0xf]
          %v1523 = vld [vmem:[%s12 + $0x4] sm:$0xf]
          %v1524 = vld [vmem:[%s12 + $0x8] sm:$0xf]
          %v1525 = vld [vmem:[%s12 + $0xc] sm:$0xf]
          %v1526 = vld [vmem:[%s13] sm:$0x1]
          %v1528 = vperm.slane %v1526, 0
          %v1534 = vunpack.c.l.b16 %v1522
          %v1535 = vunpack.c.l.b16 %v1523
          %v1536 = vunpack.c.l.b16 %v1524
          %v1537 = vunpack.c.l.b16 %v1525
          %v1538 = vpack.c.b16 %v1535, %v1534
          %v1539 = vpack.c.b16 %v1537, %v1536
          %v1543 = vsel %vm644, %v1521, 0
          %1545 = vmatpush.bf16.msra.mxu0 0
          %1546 = vmatpush.bf16.msra.mxu0 0
          %1547 = vmatpush.bf16.msra.mxu0 0
          %1548 = vmatpush.bf16.msra.mxu0 0
          %1549 = vmatpush.bf16.msra.mxu0 0
          %1550 = vmatpush.bf16.msra.mxu0 0
          %1551 = vmatpush.bf16.msra.mxu0 %v1539
          %1552 = vmatpush.bf16.msra.mxu0 %v1538
          %1553 = vmatmul.bf16.gmra.mxu0 %v1543
          %v1554 = vpop.f32.mrf.mxu0
          %v1555 = vadd.f32 %v1528, %v1554
          %v1556 = vpop.f32.mrf.mxu0
          %v1557 = vadd.f32 %v1528, %v1556
          %1558 = vdwg.mxu0
          %1559 = vmax.xlane.f32.xlu0 %v1555
          %v1560 = vpop.xlane.xlu0 %1559
          %1561 = vmax.xlane.f32.xlu0 %v1557
          %v1562 = vpop.xlane.xlu0 %1561
          %v1563 = vsub.f32 %v1555, %v1560
          %v1564 = vsub.f32 %v1557, %v1562
          %v1565 = vmul.f32 %v1563, 1.442695
          %v1566 = vpow.pop %v1565
          %v1567 = vmul.f32 %v1564, 1.442695
          %v1568 = vpow.pop %v1567
          %1569 = vadd.xlane.f32.xlu0 %v1566
          %v1570 = vpop.xlane.xlu0 %1569
          %1571 = vadd.xlane.f32.xlu0 %v1568
          %v1572 = vpop.xlane.xlu0 %1571
          %v1573 = vrcp.pop %v1570
          %v1574 = vmul.f32 %v1570, %v1573
          %v1575 = vsub.f32 1.0, %v1574
          %v1576 = vmul.f32 %v1573, %v1575
          %v1577 = vadd.f32 %v1573, %v1576
          %vm1578 = vweird.f32 %v1570
          %vm1579 = vweird.f32 %v1573
          %vm1580 = vmor %vm1578, %vm1579
          %v1581 = vsel %vm1580, %v1573, %v1577
          %v1582 = vand.u32 2147483647, %v1570
          %vm1583 = vcmp.eq.f32.partialorder %v1582, 8.507059e+37
          %v1584 = vand.u32 %v1570, 2147483648
          %v1585 = vor.u32 1.1754944e-38, %v1584
          %v1586 = vsel %vm1583, %v1585, %v1581
          %v1587 = vrcp.pop %v1572
          %v1588 = vmul.f32 %v1572, %v1587
          %v1589 = vsub.f32 1.0, %v1588
          %v1590 = vmul.f32 %v1587, %v1589
          %v1591 = vadd.f32 %v1587, %v1590
          %vm1592 = vweird.f32 %v1572
          %vm1593 = vweird.f32 %v1587
          %vm1594 = vmor %vm1592, %vm1593
          %v1595 = vsel %vm1594, %v1587, %v1591
          %v1596 = vand.u32 2147483647, %v1572
          %vm1597 = vcmp.eq.f32.partialorder %v1596, 8.507059e+37
          %v1598 = vand.u32 %v1572, 2147483648
          %v1599 = vor.u32 1.1754944e-38, %v1598
          %v1600 = vsel %vm1597, %v1599, %v1595
          %v1601 = vmul.f32 %v1566, %v1586
          %v1602 = vmul.f32 %v1568, %v1600
          %v1603 = vmul.f32 %v1601, 10000.0
          %v1604 = vmul.f32 %v1602, 10000.0
          %v1605 = vround.ne.pseudo %v1603
          %v1606 = vround.ne.pseudo %v1604
          %v1607 = vmul.f32 %v1605, 0.0001
          %v1608 = vmul.f32 %v1606, 0.0001
          %1609 = vst [vmem:[%s584] sm:$0xff] %v1607
          %1610 = vst [vmem:[%s584 + $0x8] sm:$0xff] %v1608
        $region84: #{tpu_custom_call.1} parent=75 // pred_fallthru
          _
        %s1611 = sand.u32 %s392, 1
        %s1612 = scalar_lea.sflag [#allocation4], %s1611
        %s1613 = sand.u32 %s392, 1
        %s1614 = smul.addr %s1613, 16
        %s1615 = scalar_lea.vmem [#allocation3], %s1614
        // Predicated region
        $region85: #{tpu_custom_call.1} parent=75 // pred_check
          %p1616 = pneg %p402
        $region86: #{tpu_custom_call.1} parent=75 // pred_check_branch
          %1618 = sbr.rel (%p1616) target = $region88
        $region87: #{tpu_custom_call.1} parent=75 // pred_region
          %s1619 = smul.u32 2, %s32
          %1621 = vsyncadd %s1612, 0
          %s1622 = smul.addr %s1619, 8
          %s1623 = scalar_lea.hbm %s14, %s1622
          %s1624 = sshll.u32 %s1615, 4
          %s1625 = int_to_ptr.vmem [resolvable:$true] %s1624
          %s1626 = sshll.u32 %s1623, 4
          %s1627 = int_to_ptr.hbm [resolvable:$true] %s1626
          %1632 = dma.vmem_to_hbm [thread:$0]  %s1625, 256, %s1627, %s1612, 128, 128, 8
        $region88: #{tpu_custom_call.1} parent=75 // pred_fallthru
          _
      $region76: #{tpu_custom_call.1} parent=5 // pred_fallthru
        _
      %p1633 = scmp.le.s32.totalorder 2, %s23
      // Predicated region
      $region89: #{tpu_custom_call.1} parent=5 // pred_check
        %p1634 = pneg %p1633
      $region90: #{tpu_custom_call.1} parent=5 // pred_check_branch
        %1636 = sbr.rel (%p1634) target = $region92
      $region91: #{tpu_custom_call.1} parent=5 // pred_region
        %s1637 = ssub.s32 %s23, 2
        // Predicated region
        $region93: #{tpu_custom_call.1} parent=91 // pred_check
          %p1638 = pneg %p408
        $region94: #{tpu_custom_call.1} parent=91 // pred_check_branch
          %1640 = sbr.rel (%p1638) target = $region96
        $region95: #{tpu_custom_call.1} parent=91 // pred_region
          %s1641 = sand.u32 %s393, 1
          %s1642 = scalar_lea.sflag [#allocation4], %s1641
          %s1643 = sand.u32 %s393, 1
          %s1644 = smul.addr %s1643, 16
          %s1645 = scalar_lea.vmem [#allocation3], %s1644
          %1647 = dma.done %s1642, 256
        $region96: #{tpu_custom_call.1} parent=91 // pred_fallthru
          _
      $region92: #{tpu_custom_call.1} parent=5 // pred_fallthru
        _
    $region6: #{tpu_custom_call.1} parent=1 // loop_footer
      %s27 = sadd.s32 1, %s23
    $region7: #{tpu_custom_call.1} parent=1 // loop_footer_branch
      %22 = sbr.rel target = $region3
    $region8: #{tpu_custom_call.1} parent=1 // loop_exit
      _
    %1648 = vsyncpa [#allocation4], 1
    %s1649 = scalar_lea.sflag [#allocation4], 1
    %1650 = vsyncpa %s1649, 1

</llo_original>
